<compile_context>
chip_gen: v7x
topology: tpu7x:2x2x1
jax: 0.10.0
libtpu: 0.0.40
codegen_flags: <defaults>
</compile_context>

<pallas_src>
import jax
import jax.numpy as jnp
from jax.experimental import pallas as pl
from jax.experimental.pallas import tpu as pltpu


# ----------------------------- fused Pallas kernel ---------------------------

def _make_kernel(Ho1, Wo1, Ho2, Wo2, Yp, Xp, C):
    """conv1(K-packed) + BN + ReLU -> maxpool -> residual basic block."""

    def kernel(xp_ref, w1_ref, s1_ref, w2a_ref, s2a_ref, w2b_ref, s2b_ref,
               relu1_ref, pool1_ref, layer1_ref, p1pad_ref, hpad_ref):
        f32, bf16 = jnp.float32, jnp.bfloat16

        # ---- conv1 7x7/s2/p3 (+folded BN, ReLU): ONE K-packed MXU matmul ----
        # lhs rows = output pixels of this batch element, K = 49 taps * 3ch
        # (zero-padded to 256); rhs = (256, 128) packed weights.
        r1 = jnp.dot(xp_ref[...].astype(bf16), w1_ref[...],
                     preferred_element_type=f32) + s1_ref[...]
        r1 = jnp.maximum(r1, 0.0)                      # (Ho1*Wo1, C) f32
        relu1_ref[...] = r1                            # tile-dense store

        # ---- maxpool 3x3/s2/p1 -----------------------------------------------
        # Vertical maxes for all output rows in bulk, then per-output-column
        # horizontal maxes written as Wo2 column strips into the zero-padded
        # VMEM plane (which doubles as the residual block's padded input).
        # Plane is re-zeroed every grid step => correct under megacore sharding.
        p1pad_ref[...] = jnp.zeros_like(p1pad_ref)     # zeros = implicit padding
        r1_3 = r1.reshape(Ho1, Wo1, C)                 # tile-aligned (Wo1 % 8 == 0)
        vrows = []
        for oi in range(Ho2):
            ridx = [i for i in (2 * oi - 1, 2 * oi, 2 * oi + 1) if 0 <= i < Ho1]
            v = r1_3[ridx[0]]
            for i in ridx[1:]:
                v = jnp.maximum(v, r1_3[i])            # (Wo1, C) vertical max
            vrows.append(v)
        vs = jnp.stack(vrows, axis=0)                  # (Ho2, Wo1, C)
        for oj in range(Wo2):
            cidx = [j for j in (2 * oj - 1, 2 * oj, 2 * oj + 1) if 0 <= j < Wo1]
            h = vs[:, cidx[0]:cidx[0] + 1, :]
            for j in cidx[1:]:
                h = jnp.maximum(h, vs[:, j:j + 1, :])  # (Ho2, 1, C)
            p1pad_ref[1:1 + Ho2, 1 + oj:2 + oj, :] = h
        pooled = p1pad_ref[1:1 + Ho2, 1:1 + Wo2, :]    # (Ho2, Wo2, C)
        # flat, tile-dense pool1 output (row = oi*Wo2 + oj)
        for oi in range(Ho2):
            pool1_ref[oi * Wo2:(oi + 1) * Wo2, :] = pooled[oi]

        # ---- residual basic block: two 3x3/s1/p1 convs (BN folded) ----------
        # 9 taps packed along N: one [Yp*Xp, C] x [C, 9C] matmul per conv,
        # then 9 shifted-slice accumulations (first tap initialises acc).
        def conv3x3(pad_ref, wpack_ref, shift_ref):
            plane = pad_ref[...].reshape(Yp * Xp, C).astype(bf16)
            t = jnp.dot(plane, wpack_ref[...],
                        preferred_element_type=f32)    # (Yp*Xp, 9C) f32
            acc = None
            for ki in range(3):
                for kj in range(3):
                    tap = ki * 3 + kj
                    t3 = t[:, tap * C:(tap + 1) * C].reshape(Yp, Xp, C)
                    sl = t3[ki:ki + Ho2, kj:kj + Wo2, :]
                    acc = sl if acc is None else acc + sl
            return acc + shift_ref[...].reshape(1, 1, C)

        hA = jnp.maximum(conv3x3(p1pad_ref, w2a_ref, s2a_ref), 0.0)
        hpad_ref[...] = jnp.zeros_like(hpad_ref)
        hpad_ref[1:1 + Ho2, 1:1 + Wo2, :] = hA
        l1 = jnp.maximum(conv3x3(hpad_ref, w2b_ref, s2b_ref) + pooled, 0.0)
        for oi in range(Ho2):
            layer1_ref[oi * Wo2:(oi + 1) * Wo2, :] = l1[oi]

    return kernel


def _content_forward(x_packed, w1p, s1, w2a, s2a, w2b, s2b, *,
                     N, Ho1, Wo1, Ho2, Wo2, C, Kpack):
    M1b, M2b = Ho1 * Wo1, Ho2 * Wo2
    Yp, Xp = Ho2 + 2, max(8, Wo2 + 2)   # pad plane sublane dim to a full tile

    kernel = _make_kernel(Ho1, Wo1, Ho2, Wo2, Yp, Xp, C)

    # TODO(synk): for real image sizes, additionally tile conv1 over output-row
    # blocks (second "parallel"/"arbitrary" grid axis) and set vmem_limit_bytes
    # per chip generation (v7x has 64 MiB vs 128 MiB on v5e/v6e); at these toy
    # shapes everything is VMEM-resident per batch element.
    relu1, pool1, layer1 = pl.pallas_call(
        kernel,
        out_shape=(
            jax.ShapeDtypeStruct((N * M1b, C), jnp.float32),   # relu1 (flat)
            jax.ShapeDtypeStruct((N * M2b, C), jnp.float32),   # pool1 (flat)
            jax.ShapeDtypeStruct((N * M2b, C), jnp.float32),   # layer1 (flat)
        ),
        grid_spec=pltpu.PrefetchScalarGridSpec(
            num_scalar_prefetch=0,
            grid=(N,),
            in_specs=[
                pl.BlockSpec((M1b, Kpack), lambda b: (b, 0)),   # packed conv1 lhs
                pl.BlockSpec((Kpack, C), lambda b: (0, 0)),     # conv1 weights
                pl.BlockSpec((1, C), lambda b: (0, 0)),         # conv1 BN shift
                pl.BlockSpec((C, 9 * C), lambda b: (0, 0)),     # block conv A
                pl.BlockSpec((1, C), lambda b: (0, 0)),
                pl.BlockSpec((C, 9 * C), lambda b: (0, 0)),     # block conv B
                pl.BlockSpec((1, C), lambda b: (0, 0)),
            ],
            out_specs=(
                pl.BlockSpec((M1b, C), lambda b: (b, 0)),
                pl.BlockSpec((M2b, C), lambda b: (b, 0)),
                pl.BlockSpec((M2b, C), lambda b: (b, 0)),
            ),
            scratch_shapes=[pltpu.VMEM((Yp, Xp, C), jnp.float32),
                            pltpu.VMEM((Yp, Xp, C), jnp.float32)],
        ),
        compiler_params=pltpu.CompilerParams(
            dimension_semantics=("parallel",)),   # shards batch over v7x's 2 TCs
    )(x_packed, w1p, s1, w2a, s2a, w2b, s2b)
    return relu1, pool1, layer1


# ------------------------------- parameter prep ------------------------------

def _fold_bn(w_oihw, bn, eps=1e-5):
    """Fold frozen BN into conv weights; return (kh,kw,Cin,Cout) taps + shift."""
    gamma, beta, mean, var = bn
    scale = gamma / jnp.sqrt(var + eps)
    shift = beta - mean * scale
    taps = jnp.transpose(w_oihw, (2, 3, 1, 0)) * scale[None, None, None, :]
    return taps, shift.reshape(1, -1).astype(jnp.float32)


def _pack_conv1_k(taps, k_pack):
    """Pack 7x7 taps along the contraction axis -> (k_pack, Cout) bf16."""
    kh, kw, cin, cout = taps.shape
    m = taps.reshape(kh * kw * cin, cout)
    m = jnp.pad(m, ((0, k_pack - kh * kw * cin), (0, 0)))
    return m.astype(jnp.bfloat16)


def _pack_conv3x3_n(taps):
    """Pack 3x3 taps along the output (N) axis -> (Cin, 9*Cout) bf16."""
    kh, kw, cin, cout = taps.shape
    return jnp.transpose(taps, (2, 0, 1, 3)).reshape(
        cin, kh * kw * cout).astype(jnp.bfloat16)


# ------------------------------ Content_Model port ---------------------------

class ContentModelPallas:
    """Pallas port of Content_Model: frozen ResNet-style feature extractor.

    fix_grad => frozen weights; model.eval() => BatchNorm uses running stats,
    folded into bf16 conv weights + f32 per-channel shifts.
    """

    def __init__(self, cfg, key=jax.random.PRNGKey(42), width=128):
        # TODO(synk): pretrained torchvision ResNet weights cannot be loaded
        # here; a deterministic synthetic ResNet-style stem + basic block with
        # the same frozen-eval semantics is used instead.
        self.cfg = cfg
        self.width = C = width
        self.cin = 3
        self.kpack = ((49 * self.cin + 127) // 128) * 128    # 147 -> 256
        ks = jax.random.split(key, 8)

        def normal(k, shape, s=0.05):
            return s * jax.random.normal(k, shape, dtype=jnp.float32)

        # stem: conv7x7/s2 (3 -> C), BN1
        w1 = normal(ks[0], (C, self.cin, 7, 7))
        bn1 = (1.0 + normal(ks[1], (C,), 0.01),                       # gamma
               normal(ks[2], (C,), 0.01),                             # beta
               normal(ks[3], (C,), 0.01),                             # running mean
               1.0 + 0.01 * jnp.abs(jax.random.normal(ks[4], (C,))))  # running var

        # layer1: one basic block (C -> C), two 3x3 convs, identity BNs
        w2a = normal(ks[5], (C, C, 3, 3))
        w2b = normal(ks[6], (C, C, 3, 3))
        bn_id = (jnp.ones((C,)), jnp.zeros((C,)), jnp.zeros((C,)), jnp.ones((C,)))

        t1, self.s1 = _fold_bn(w1, bn1)
        self.w1p = _pack_conv1_k(t1, self.kpack)
        t2a, self.s2a = _fold_bn(w2a, bn_id)
        self.w2a = _pack_conv3x3_n(t2a)
        t2b, self.s2b = _fold_bn(w2b, bn_id)
        self.w2b = _pack_conv3x3_n(t2b)

    def __call__(self, x_nchw, in_channel=3, layers=None):
        if layers is None:
            layers = self.cfg["CONTENT_LAYERS"].split(",")

        N, Cin, H, W = x_nchw.shape
        assert Cin == self.cin, "expected 3-channel input"
        assert H % 2 == 0 and W % 2 == 0, "even spatial dims expected"
        C = self.width

        Hp, Wp = H + 6, W + 6
        Ho1, Wo1 = (Hp - 7) // 2 + 1, (Wp - 7) // 2 + 1
        Ho2, Wo2 = (Ho1 - 1) // 2 + 1, (Wo1 - 1) // 2 + 1
        assert Wo1 % 8 == 0, "conv1 output width must be a sublane multiple"

        # K-packed conv1 lhs (layout plumbing in the wrapper: per output pixel,
        # all 49 taps x 3 channels concatenated, zero-padded to kpack=256).
        # TODO(synk): at real image sizes build this in-kernel from a stride-2
        # phase split (the im2col below duplicates HBM ~49x); trivial at toy size.
        x = jnp.transpose(x_nchw, (0, 2, 3, 1)).astype(jnp.float32)
        xpad = jnp.pad(x, ((0, 0), (3, 3), (3, 3), (0, 0)))
        wins = [xpad[:, ki:ki + 2 * Ho1 - 1:2, kj:kj + 2 * Wo1 - 1:2, :]
                for ki in range(7) for kj in range(7)]
        lhs = jnp.concatenate(wins, axis=-1)                       # (N,Ho1,Wo1,147)
        lhs = jnp.pad(lhs, ((0, 0), (0, 0), (0, 0),
                            (0, self.kpack - 49 * Cin)))
        x_packed = lhs.reshape(N * Ho1 * Wo1, self.kpack)

        relu1, pool1, layer1 = _content_forward(
            x_packed, self.w1p, self.s1, self.w2a, self.s2a, self.w2b, self.s2b,
            N=N, Ho1=Ho1, Wo1=Wo1, Ho2=Ho2, Wo2=Wo2, C=C, Kpack=self.kpack)

        feats = {
            "relu1": jnp.transpose(relu1.reshape(N, Ho1, Wo1, C), (0, 3, 1, 2)),
            "pool1": jnp.transpose(pool1.reshape(N, Ho2, Wo2, C), (0, 3, 1, 2)),
            "layer1": jnp.transpose(layer1.reshape(N, Ho2, Wo2, C), (0, 3, 1, 2)),
        }
        return {name: feats[name] for name in layers if name in feats}


# ------------------------------------ main ------------------------------------

if __name__ == "__main__":
    cfg = {"WHICH_CONTENT_NET": "resnet18", "CONTENT_LAYERS": "relu1,layer1"}

    key = jax.random.PRNGKey(0)
    x = jax.random.normal(key, (2, 3, 16, 16), dtype=jnp.float32)   # NCHW

    model = ContentModelPallas(cfg, key=jax.random.PRNGKey(42), width=128)
    layer_wise_features = model(x)

    for name, feat in layer_wise_features.items():
        jax.block_until_ready(feat)

    # sanity: conv1 16x16 -> 8x8; residual block after maxpool -> 4x4
    assert layer_wise_features["relu1"].shape == (2, 128, 8, 8)
    assert layer_wise_features["layer1"].shape == (2, 128, 4, 4)
    assert bool(jnp.all(jnp.isfinite(layer_wise_features["relu1"])))
    assert bool(jnp.all(jnp.isfinite(layer_wise_features["layer1"])))

    print("KERNEL_OK")
</pallas_src>

<mosaic_0001>
module attributes {stable_mosaic.version = 11 : i64} {
  func.func @kernel(%arg0: i32, %arg1: memref<64x256xf32, #tpu.memory_space<vmem>>, %arg2: memref<256x128xbf16, #tpu.memory_space<vmem>>, %arg3: memref<1x128xf32, #tpu.memory_space<vmem>>, %arg4: memref<128x1152xbf16, #tpu.memory_space<vmem>>, %arg5: memref<1x128xf32, #tpu.memory_space<vmem>>, %arg6: memref<128x1152xbf16, #tpu.memory_space<vmem>>, %arg7: memref<1x128xf32, #tpu.memory_space<vmem>>, %arg8: memref<64x128xf32, #tpu.memory_space<vmem>>, %arg9: memref<16x128xf32, #tpu.memory_space<vmem>>, %arg10: memref<16x128xf32, #tpu.memory_space<vmem>>, %arg11: memref<6x8x128xf32, #tpu.memory_space<vmem>>, %arg12: memref<6x8x128xf32, #tpu.memory_space<vmem>>) attributes {dimension_semantics = [#tpu.dimension_semantics<parallel>], iteration_bounds = array<i64: 2>, scalar_prefetch = 0 : i64, scratch_operands = 2 : i64, tpu.core_type = #tpu.core_type<tc>, window_params = [{transform_indices = @transform_0, window_bounds = array<i64: 64, 256>}, {pipeline_mode = #tpu.pipeline_mode<synchronous>, transform_indices = @transform_1, window_bounds = array<i64: 256, 128>}, {pipeline_mode = #tpu.pipeline_mode<synchronous>, transform_indices = @transform_2, window_bounds = array<i64: 1, 128>}, {pipeline_mode = #tpu.pipeline_mode<synchronous>, transform_indices = @transform_3, window_bounds = array<i64: 128, 1152>}, {pipeline_mode = #tpu.pipeline_mode<synchronous>, transform_indices = @transform_4, window_bounds = array<i64: 1, 128>}, {pipeline_mode = #tpu.pipeline_mode<synchronous>, transform_indices = @transform_5, window_bounds = array<i64: 128, 1152>}, {pipeline_mode = #tpu.pipeline_mode<synchronous>, transform_indices = @transform_6, window_bounds = array<i64: 1, 128>}, {transform_indices = @transform_7, window_bounds = array<i64: 64, 128>}, {transform_indices = @transform_8, window_bounds = array<i64: 16, 128>}, {transform_indices = @transform_9, window_bounds = array<i64: 16, 128>}]} {
    %c0 = arith.constant 0 : index
    %c0_0 = arith.constant 0 : index
    %0 = vector.load %arg1[%c0, %c0_0] : memref<64x256xf32, #tpu.memory_space<vmem>>, vector<64x256xf32>
    %1 = arith.truncf %0 : vector<64x256xf32> to vector<64x256xbf16>
    %c0_1 = arith.constant 0 : index
    %c0_2 = arith.constant 0 : index
    %2 = vector.load %arg2[%c0_1, %c0_2] : memref<256x128xbf16, #tpu.memory_space<vmem>>, vector<256x128xbf16>
    %cst = arith.constant dense<0.000000e+00> : vector<64x128xf32>
    %3 = tpu.matmul %1, %2, %cst {dimension_numbers = #tpu.dot_dimension_numbers<[1], [0], [0], [1], [0, 0, 1, 1], [], []>} : vector<64x256xbf16>, vector<256x128xbf16>, vector<64x128xf32> -> vector<64x128xf32>
    %c0_3 = arith.constant 0 : index
    %c0_4 = arith.constant 0 : index
    %4 = vector.load %arg3[%c0_3, %c0_4] : memref<1x128xf32, #tpu.memory_space<vmem>>, vector<1x128xf32>
    %5 = vector.broadcast %4 : vector<1x128xf32> to vector<64x128xf32>
    %6 = arith.addf %3, %5 : vector<64x128xf32>
    %cst_5 = arith.constant 0.000000e+00 : f32
    %7 = vector.broadcast %cst_5 : f32 to vector<64x128xf32>
    %8 = arith.maximumf %6, %7 : vector<64x128xf32>
    %c0_6 = arith.constant 0 : index
    %c0_7 = arith.constant 0 : index
    %9 = vector.load %arg8[%c0_6, %c0_7] : memref<64x128xf32, #tpu.memory_space<vmem>>, vector<64x128xf32>
    tpu.vector_store %arg8[%c0_6, %c0_7], %8 {strides = array<i32>} : memref<64x128xf32, #tpu.memory_space<vmem>>, vector<64x128xf32>,
    %cst_8 = arith.constant 0.000000e+00 : f32
    %10 = vector.broadcast %cst_8 : f32 to vector<6x8x128xf32>
    %c0_9 = arith.constant 0 : index
    %c0_10 = arith.constant 0 : index
    %c0_11 = arith.constant 0 : index
    %11 = vector.load %arg11[%c0_9, %c0_10, %c0_11] : memref<6x8x128xf32, #tpu.memory_space<vmem>>, vector<6x8x128xf32>
    tpu.vector_store %arg11[%c0_9, %c0_10, %c0_11], %10 {strides = array<i32>} : memref<6x8x128xf32, #tpu.memory_space<vmem>>, vector<6x8x128xf32>,
    %12 = vector.shape_cast %8 : vector<64x128xf32> to vector<8x8x128xf32>
    %13 = vector.extract_strided_slice %12 {offsets = [0, 0, 0], sizes = [1, 8, 128], strides = [1, 1, 1]} : vector<8x8x128xf32> to vector<1x8x128xf32>
    %14 = vector.shape_cast %13 : vector<1x8x128xf32> to vector<8x128xf32>
    %15 = vector.extract_strided_slice %12 {offsets = [1, 0, 0], sizes = [1, 8, 128], strides = [1, 1, 1]} : vector<8x8x128xf32> to vector<1x8x128xf32>
    %16 = vector.shape_cast %15 : vector<1x8x128xf32> to vector<8x128xf32>
    %17 = arith.maximumf %14, %16 : vector<8x128xf32>
    %18 = vector.extract_strided_slice %12 {offsets = [1, 0, 0], sizes = [1, 8, 128], strides = [1, 1, 1]} : vector<8x8x128xf32> to vector<1x8x128xf32>
    %19 = vector.shape_cast %18 : vector<1x8x128xf32> to vector<8x128xf32>
    %20 = vector.extract_strided_slice %12 {offsets = [2, 0, 0], sizes = [1, 8, 128], strides = [1, 1, 1]} : vector<8x8x128xf32> to vector<1x8x128xf32>
    %21 = vector.shape_cast %20 : vector<1x8x128xf32> to vector<8x128xf32>
    %22 = arith.maximumf %19, %21 : vector<8x128xf32>
    %23 = vector.extract_strided_slice %12 {offsets = [3, 0, 0], sizes = [1, 8, 128], strides = [1, 1, 1]} : vector<8x8x128xf32> to vector<1x8x128xf32>
    %24 = vector.shape_cast %23 : vector<1x8x128xf32> to vector<8x128xf32>
    %25 = arith.maximumf %22, %24 : vector<8x128xf32>
    %26 = vector.extract_strided_slice %12 {offsets = [3, 0, 0], sizes = [1, 8, 128], strides = [1, 1, 1]} : vector<8x8x128xf32> to vector<1x8x128xf32>
    %27 = vector.shape_cast %26 : vector<1x8x128xf32> to vector<8x128xf32>
    %28 = vector.extract_strided_slice %12 {offsets = [4, 0, 0], sizes = [1, 8, 128], strides = [1, 1, 1]} : vector<8x8x128xf32> to vector<1x8x128xf32>
    %29 = vector.shape_cast %28 : vector<1x8x128xf32> to vector<8x128xf32>
    %30 = arith.maximumf %27, %29 : vector<8x128xf32>
    %31 = vector.extract_strided_slice %12 {offsets = [5, 0, 0], sizes = [1, 8, 128], strides = [1, 1, 1]} : vector<8x8x128xf32> to vector<1x8x128xf32>
    %32 = vector.shape_cast %31 : vector<1x8x128xf32> to vector<8x128xf32>
    %33 = arith.maximumf %30, %32 : vector<8x128xf32>
    %34 = vector.extract_strided_slice %12 {offsets = [5, 0, 0], sizes = [1, 8, 128], strides = [1, 1, 1]} : vector<8x8x128xf32> to vector<1x8x128xf32>
    %35 = vector.shape_cast %34 : vector<1x8x128xf32> to vector<8x128xf32>
    %36 = vector.extract_strided_slice %12 {offsets = [6, 0, 0], sizes = [1, 8, 128], strides = [1, 1, 1]} : vector<8x8x128xf32> to vector<1x8x128xf32>
    %37 = vector.shape_cast %36 : vector<1x8x128xf32> to vector<8x128xf32>
    %38 = arith.maximumf %35, %37 : vector<8x128xf32>
    %39 = vector.extract_strided_slice %12 {offsets = [7, 0, 0], sizes = [1, 8, 128], strides = [1, 1, 1]} : vector<8x8x128xf32> to vector<1x8x128xf32>
    %40 = vector.shape_cast %39 : vector<1x8x128xf32> to vector<8x128xf32>
    %41 = arith.maximumf %38, %40 : vector<8x128xf32>
    %42 = vector.shape_cast %17 : vector<8x128xf32> to vector<1x8x128xf32>
    %43 = vector.shape_cast %25 : vector<8x128xf32> to vector<1x8x128xf32>
    %44 = vector.shape_cast %33 : vector<8x128xf32> to vector<1x8x128xf32>
    %45 = vector.shape_cast %41 : vector<8x128xf32> to vector<1x8x128xf32>
    %46 = tpu.concatenate %42, %43, %44, %45 in 0 : vector<1x8x128xf32>, vector<1x8x128xf32>, vector<1x8x128xf32>, vector<1x8x128xf32> -> vector<4x8x128xf32>
    %47 = vector.extract_strided_slice %46 {offsets = [0, 0, 0], sizes = [4, 1, 128], strides = [1, 1, 1]} : vector<4x8x128xf32> to vector<4x1x128xf32>
    %48 = vector.extract_strided_slice %46 {offsets = [0, 1, 0], sizes = [4, 1, 128], strides = [1, 1, 1]} : vector<4x8x128xf32> to vector<4x1x128xf32>
    %49 = arith.maximumf %47, %48 : vector<4x1x128xf32>
    %c1 = arith.constant 1 : index
    %c1_12 = arith.constant 1 : index
    %c0_13 = arith.constant 0 : index
    %50 = vector.load %arg11[%c1, %c1_12, %c0_13] : memref<6x8x128xf32, #tpu.memory_space<vmem>>, vector<4x1x128xf32>
    tpu.vector_store %arg11[%c1, %c1_12, %c0_13], %49 {strides = array<i32>} : memref<6x8x128xf32, #tpu.memory_space<vmem>>, vector<4x1x128xf32>,
    %51 = vector.extract_strided_slice %46 {offsets = [0, 1, 0], sizes = [4, 1, 128], strides = [1, 1, 1]} : vector<4x8x128xf32> to vector<4x1x128xf32>
    %52 = vector.extract_strided_slice %46 {offsets = [0, 2, 0], sizes = [4, 1, 128], strides = [1, 1, 1]} : vector<4x8x128xf32> to vector<4x1x128xf32>
    %53 = arith.maximumf %51, %52 : vector<4x1x128xf32>
    %54 = vector.extract_strided_slice %46 {offsets = [0, 3, 0], sizes = [4, 1, 128], strides = [1, 1, 1]} : vector<4x8x128xf32> to vector<4x1x128xf32>
    %55 = arith.maximumf %53, %54 : vector<4x1x128xf32>
    %c1_14 = arith.constant 1 : index
    %c2 = arith.constant 2 : index
    %c0_15 = arith.constant 0 : index
    %56 = vector.load %arg11[%c1_14, %c2, %c0_15] : memref<6x8x128xf32, #tpu.memory_space<vmem>>, vector<4x1x128xf32>
    tpu.vector_store %arg11[%c1_14, %c2, %c0_15], %55 {strides = array<i32>} : memref<6x8x128xf32, #tpu.memory_space<vmem>>, vector<4x1x128xf32>,
    %57 = vector.extract_strided_slice %46 {offsets = [0, 3, 0], sizes = [4, 1, 128], strides = [1, 1, 1]} : vector<4x8x128xf32> to vector<4x1x128xf32>
    %58 = vector.extract_strided_slice %46 {offsets = [0, 4, 0], sizes = [4, 1, 128], strides = [1, 1, 1]} : vector<4x8x128xf32> to vector<4x1x128xf32>
    %59 = arith.maximumf %57, %58 : vector<4x1x128xf32>
    %60 = vector.extract_strided_slice %46 {offsets = [0, 5, 0], sizes = [4, 1, 128], strides = [1, 1, 1]} : vector<4x8x128xf32> to vector<4x1x128xf32>
    %61 = arith.maximumf %59, %60 : vector<4x1x128xf32>
    %c1_16 = arith.constant 1 : index
    %c3 = arith.constant 3 : index
    %c0_17 = arith.constant 0 : index
    %62 = vector.load %arg11[%c1_16, %c3, %c0_17] : memref<6x8x128xf32, #tpu.memory_space<vmem>>, vector<4x1x128xf32>
    tpu.vector_store %arg11[%c1_16, %c3, %c0_17], %61 {strides = array<i32>} : memref<6x8x128xf32, #tpu.memory_space<vmem>>, vector<4x1x128xf32>,
    %63 = vector.extract_strided_slice %46 {offsets = [0, 5, 0], sizes = [4, 1, 128], strides = [1, 1, 1]} : vector<4x8x128xf32> to vector<4x1x128xf32>
    %64 = vector.extract_strided_slice %46 {offsets = [0, 6, 0], sizes = [4, 1, 128], strides = [1, 1, 1]} : vector<4x8x128xf32> to vector<4x1x128xf32>
    %65 = arith.maximumf %63, %64 : vector<4x1x128xf32>
    %66 = vector.extract_strided_slice %46 {offsets = [0, 7, 0], sizes = [4, 1, 128], strides = [1, 1, 1]} : vector<4x8x128xf32> to vector<4x1x128xf32>
    %67 = arith.maximumf %65, %66 : vector<4x1x128xf32>
    %c1_18 = arith.constant 1 : index
    %c4 = arith.constant 4 : index
    %c0_19 = arith.constant 0 : index
    %68 = vector.load %arg11[%c1_18, %c4, %c0_19] : memref<6x8x128xf32, #tpu.memory_space<vmem>>, vector<4x1x128xf32>
    tpu.vector_store %arg11[%c1_18, %c4, %c0_19], %67 {strides = array<i32>} : memref<6x8x128xf32, #tpu.memory_space<vmem>>, vector<4x1x128xf32>,
    %c1_20 = arith.constant 1 : index
    %c1_21 = arith.constant 1 : index
    %c0_22 = arith.constant 0 : index
    %69 = vector.load %arg11[%c1_20, %c1_21, %c0_22] : memref<6x8x128xf32, #tpu.memory_space<vmem>>, vector<4x4x128xf32>
    %70 = vector.extract_strided_slice %69 {offsets = [0, 0, 0], sizes = [1, 4, 128], strides = [1, 1, 1]} : vector<4x4x128xf32> to vector<1x4x128xf32>
    %71 = vector.shape_cast %70 : vector<1x4x128xf32> to vector<4x128xf32>
    %c0_23 = arith.constant 0 : index
    %c0_24 = arith.constant 0 : index
    %72 = vector.load %arg9[%c0_23, %c0_24] : memref<16x128xf32, #tpu.memory_space<vmem>>, vector<4x128xf32>
    tpu.vector_store %arg9[%c0_23, %c0_24], %71 {strides = array<i32>} : memref<16x128xf32, #tpu.memory_space<vmem>>, vector<4x128xf32>,
    %73 = vector.extract_strided_slice %69 {offsets = [1, 0, 0], sizes = [1, 4, 128], strides = [1, 1, 1]} : vector<4x4x128xf32> to vector<1x4x128xf32>
    %74 = vector.shape_cast %73 : vector<1x4x128xf32> to vector<4x128xf32>
    %c4_25 = arith.constant 4 : index
    %c0_26 = arith.constant 0 : index
    %75 = vector.load %arg9[%c4_25, %c0_26] : memref<16x128xf32, #tpu.memory_space<vmem>>, vector<4x128xf32>
    tpu.vector_store %arg9[%c4_25, %c0_26], %74 {strides = array<i32>} : memref<16x128xf32, #tpu.memory_space<vmem>>, vector<4x128xf32>,
    %76 = vector.extract_strided_slice %69 {offsets = [2, 0, 0], sizes = [1, 4, 128], strides = [1, 1, 1]} : vector<4x4x128xf32> to vector<1x4x128xf32>
    %77 = vector.shape_cast %76 : vector<1x4x128xf32> to vector<4x128xf32>
    %c8 = arith.constant 8 : index
    %c0_27 = arith.constant 0 : index
    %78 = vector.load %arg9[%c8, %c0_27] : memref<16x128xf32, #tpu.memory_space<vmem>>, vector<4x128xf32>
    tpu.vector_store %arg9[%c8, %c0_27], %77 {strides = array<i32>} : memref<16x128xf32, #tpu.memory_space<vmem>>, vector<4x128xf32>,
    %79 = vector.extract_strided_slice %69 {offsets = [3, 0, 0], sizes = [1, 4, 128], strides = [1, 1, 1]} : vector<4x4x128xf32> to vector<1x4x128xf32>
    %80 = vector.shape_cast %79 : vector<1x4x128xf32> to vector<4x128xf32>
    %c12 = arith.constant 12 : index
    %c0_28 = arith.constant 0 : index
    %81 = vector.load %arg9[%c12, %c0_28] : memref<16x128xf32, #tpu.memory_space<vmem>>, vector<4x128xf32>
    tpu.vector_store %arg9[%c12, %c0_28], %80 {strides = array<i32>} : memref<16x128xf32, #tpu.memory_space<vmem>>, vector<4x128xf32>,
    %c0_29 = arith.constant 0 : index
    %c0_30 = arith.constant 0 : index
    %c0_31 = arith.constant 0 : index
    %82 = vector.load %arg11[%c0_29, %c0_30, %c0_31] : memref<6x8x128xf32, #tpu.memory_space<vmem>>, vector<6x8x128xf32>
    %83 = vector.shape_cast %82 : vector<6x8x128xf32> to vector<48x128xf32>
    %84 = arith.truncf %83 : vector<48x128xf32> to vector<48x128xbf16>
    %c0_32 = arith.constant 0 : index
    %c0_33 = arith.constant 0 : index
    %85 = vector.load %arg4[%c0_32, %c0_33] : memref<128x1152xbf16, #tpu.memory_space<vmem>>, vector<128x1152xbf16>
    %cst_34 = arith.constant dense<0.000000e+00> : vector<48x1152xf32>
    %86 = tpu.matmul %84, %85, %cst_34 {dimension_numbers = #tpu.dot_dimension_numbers<[1], [0], [0], [1], [0, 0, 1, 1], [], []>} : vector<48x128xbf16>, vector<128x1152xbf16>, vector<48x1152xf32> -> vector<48x1152xf32>
    %87 = vector.extract_strided_slice %86 {offsets = [0, 0], sizes = [48, 128], strides = [1, 1]} : vector<48x1152xf32> to vector<48x128xf32>
    %88 = vector.shape_cast %87 : vector<48x128xf32> to vector<6x8x128xf32>
    %89 = vector.extract_strided_slice %88 {offsets = [0, 0, 0], sizes = [4, 4, 128], strides = [1, 1, 1]} : vector<6x8x128xf32> to vector<4x4x128xf32>
    %90 = vector.extract_strided_slice %86 {offsets = [0, 128], sizes = [48, 128], strides = [1, 1]} : vector<48x1152xf32> to vector<48x128xf32>
    %91 = vector.shape_cast %90 : vector<48x128xf32> to vector<6x8x128xf32>
    %92 = vector.extract_strided_slice %91 {offsets = [0, 1, 0], sizes = [4, 4, 128], strides = [1, 1, 1]} : vector<6x8x128xf32> to vector<4x4x128xf32>
    %93 = arith.addf %89, %92 : vector<4x4x128xf32>
    %94 = vector.extract_strided_slice %86 {offsets = [0, 256], sizes = [48, 128], strides = [1, 1]} : vector<48x1152xf32> to vector<48x128xf32>
    %95 = vector.shape_cast %94 : vector<48x128xf32> to vector<6x8x128xf32>
    %96 = vector.extract_strided_slice %95 {offsets = [0, 2, 0], sizes = [4, 4, 128], strides = [1, 1, 1]} : vector<6x8x128xf32> to vector<4x4x128xf32>
    %97 = arith.addf %93, %96 : vector<4x4x128xf32>
    %98 = vector.extract_strided_slice %86 {offsets = [0, 384], sizes = [48, 128], strides = [1, 1]} : vector<48x1152xf32> to vector<48x128xf32>
    %99 = vector.shape_cast %98 : vector<48x128xf32> to vector<6x8x128xf32>
    %100 = vector.extract_strided_slice %99 {offsets = [1, 0, 0], sizes = [4, 4, 128], strides = [1, 1, 1]} : vector<6x8x128xf32> to vector<4x4x128xf32>
    %101 = arith.addf %97, %100 : vector<4x4x128xf32>
    %102 = vector.extract_strided_slice %86 {offsets = [0, 512], sizes = [48, 128], strides = [1, 1]} : vector<48x1152xf32> to vector<48x128xf32>
    %103 = vector.shape_cast %102 : vector<48x128xf32> to vector<6x8x128xf32>
    %104 = vector.extract_strided_slice %103 {offsets = [1, 1, 0], sizes = [4, 4, 128], strides = [1, 1, 1]} : vector<6x8x128xf32> to vector<4x4x128xf32>
    %105 = arith.addf %101, %104 : vector<4x4x128xf32>
    %106 = vector.extract_strided_slice %86 {offsets = [0, 640], sizes = [48, 128], strides = [1, 1]} : vector<48x1152xf32> to vector<48x128xf32>
    %107 = vector.shape_cast %106 : vector<48x128xf32> to vector<6x8x128xf32>
    %108 = vector.extract_strided_slice %107 {offsets = [1, 2, 0], sizes = [4, 4, 128], strides = [1, 1, 1]} : vector<6x8x128xf32> to vector<4x4x128xf32>
    %109 = arith.addf %105, %108 : vector<4x4x128xf32>
    %110 = vector.extract_strided_slice %86 {offsets = [0, 768], sizes = [48, 128], strides = [1, 1]} : vector<48x1152xf32> to vector<48x128xf32>
    %111 = vector.shape_cast %110 : vector<48x128xf32> to vector<6x8x128xf32>
    %112 = vector.extract_strided_slice %111 {offsets = [2, 0, 0], sizes = [4, 4, 128], strides = [1, 1, 1]} : vector<6x8x128xf32> to vector<4x4x128xf32>
    %113 = arith.addf %109, %112 : vector<4x4x128xf32>
    %114 = vector.extract_strided_slice %86 {offsets = [0, 896], sizes = [48, 128], strides = [1, 1]} : vector<48x1152xf32> to vector<48x128xf32>
    %115 = vector.shape_cast %114 : vector<48x128xf32> to vector<6x8x128xf32>
    %116 = vector.extract_strided_slice %115 {offsets = [2, 1, 0], sizes = [4, 4, 128], strides = [1, 1, 1]} : vector<6x8x128xf32> to vector<4x4x128xf32>
    %117 = arith.addf %113, %116 : vector<4x4x128xf32>
    %118 = vector.extract_strided_slice %86 {offsets = [0, 1024], sizes = [48, 128], strides = [1, 1]} : vector<48x1152xf32> to vector<48x128xf32>
    %119 = vector.shape_cast %118 : vector<48x128xf32> to vector<6x8x128xf32>
    %120 = vector.extract_strided_slice %119 {offsets = [2, 2, 0], sizes = [4, 4, 128], strides = [1, 1, 1]} : vector<6x8x128xf32> to vector<4x4x128xf32>
    %121 = arith.addf %117, %120 : vector<4x4x128xf32>
    %c0_35 = arith.constant 0 : index
    %c0_36 = arith.constant 0 : index
    %122 = vector.load %arg5[%c0_35, %c0_36] : memref<1x128xf32, #tpu.memory_space<vmem>>, vector<1x128xf32>
    %123 = vector.shape_cast %122 : vector<1x128xf32> to vector<1x1x128xf32>
    %124 = vector.broadcast %123 : vector<1x1x128xf32> to vector<4x4x128xf32>
    %125 = arith.addf %121, %124 : vector<4x4x128xf32>
    %cst_37 = arith.constant 0.000000e+00 : f32
    %126 = vector.broadcast %cst_37 : f32 to vector<4x4x128xf32>
    %127 = arith.maximumf %125, %126 : vector<4x4x128xf32>
    %cst_38 = arith.constant 0.000000e+00 : f32
    %128 = vector.broadcast %cst_38 : f32 to vector<6x8x128xf32>
    %c0_39 = arith.constant 0 : index
    %c0_40 = arith.constant 0 : index
    %c0_41 = arith.constant 0 : index
    %129 = vector.load %arg12[%c0_39, %c0_40, %c0_41] : memref<6x8x128xf32, #tpu.memory_space<vmem>>, vector<6x8x128xf32>
    tpu.vector_store %arg12[%c0_39, %c0_40, %c0_41], %128 {strides = array<i32>} : memref<6x8x128xf32, #tpu.memory_space<vmem>>, vector<6x8x128xf32>,
    %c1_42 = arith.constant 1 : index
    %c1_43 = arith.constant 1 : index
    %c0_44 = arith.constant 0 : index
    %130 = vector.load %arg12[%c1_42, %c1_43, %c0_44] : memref<6x8x128xf32, #tpu.memory_space<vmem>>, vector<4x4x128xf32>
    tpu.vector_store %arg12[%c1_42, %c1_43, %c0_44], %127 {strides = array<i32>} : memref<6x8x128xf32, #tpu.memory_space<vmem>>, vector<4x4x128xf32>,
    %c0_45 = arith.constant 0 : index
    %c0_46 = arith.constant 0 : index
    %c0_47 = arith.constant 0 : index
    %131 = vector.load %arg12[%c0_45, %c0_46, %c0_47] : memref<6x8x128xf32, #tpu.memory_space<vmem>>, vector<6x8x128xf32>
    %132 = vector.shape_cast %131 : vector<6x8x128xf32> to vector<48x128xf32>
    %133 = arith.truncf %132 : vector<48x128xf32> to vector<48x128xbf16>
    %c0_48 = arith.constant 0 : index
    %c0_49 = arith.constant 0 : index
    %134 = vector.load %arg6[%c0_48, %c0_49] : memref<128x1152xbf16, #tpu.memory_space<vmem>>, vector<128x1152xbf16>
    %cst_50 = arith.constant dense<0.000000e+00> : vector<48x1152xf32>
    %135 = tpu.matmul %133, %134, %cst_50 {dimension_numbers = #tpu.dot_dimension_numbers<[1], [0], [0], [1], [0, 0, 1, 1], [], []>} : vector<48x128xbf16>, vector<128x1152xbf16>, vector<48x1152xf32> -> vector<48x1152xf32>
    %136 = vector.extract_strided_slice %135 {offsets = [0, 0], sizes = [48, 128], strides = [1, 1]} : vector<48x1152xf32> to vector<48x128xf32>
    %137 = vector.shape_cast %136 : vector<48x128xf32> to vector<6x8x128xf32>
    %138 = vector.extract_strided_slice %137 {offsets = [0, 0, 0], sizes = [4, 4, 128], strides = [1, 1, 1]} : vector<6x8x128xf32> to vector<4x4x128xf32>
    %139 = vector.extract_strided_slice %135 {offsets = [0, 128], sizes = [48, 128], strides = [1, 1]} : vector<48x1152xf32> to vector<48x128xf32>
    %140 = vector.shape_cast %139 : vector<48x128xf32> to vector<6x8x128xf32>
    %141 = vector.extract_strided_slice %140 {offsets = [0, 1, 0], sizes = [4, 4, 128], strides = [1, 1, 1]} : vector<6x8x128xf32> to vector<4x4x128xf32>
    %142 = arith.addf %138, %141 : vector<4x4x128xf32>
    %143 = vector.extract_strided_slice %135 {offsets = [0, 256], sizes = [48, 128], strides = [1, 1]} : vector<48x1152xf32> to vector<48x128xf32>
    %144 = vector.shape_cast %143 : vector<48x128xf32> to vector<6x8x128xf32>
    %145 = vector.extract_strided_slice %144 {offsets = [0, 2, 0], sizes = [4, 4, 128], strides = [1, 1, 1]} : vector<6x8x128xf32> to vector<4x4x128xf32>
    %146 = arith.addf %142, %145 : vector<4x4x128xf32>
    %147 = vector.extract_strided_slice %135 {offsets = [0, 384], sizes = [48, 128], strides = [1, 1]} : vector<48x1152xf32> to vector<48x128xf32>
    %148 = vector.shape_cast %147 : vector<48x128xf32> to vector<6x8x128xf32>
    %149 = vector.extract_strided_slice %148 {offsets = [1, 0, 0], sizes = [4, 4, 128], strides = [1, 1, 1]} : vector<6x8x128xf32> to vector<4x4x128xf32>
    %150 = arith.addf %146, %149 : vector<4x4x128xf32>
    %151 = vector.extract_strided_slice %135 {offsets = [0, 512], sizes = [48, 128], strides = [1, 1]} : vector<48x1152xf32> to vector<48x128xf32>
    %152 = vector.shape_cast %151 : vector<48x128xf32> to vector<6x8x128xf32>
    %153 = vector.extract_strided_slice %152 {offsets = [1, 1, 0], sizes = [4, 4, 128], strides = [1, 1, 1]} : vector<6x8x128xf32> to vector<4x4x128xf32>
    %154 = arith.addf %150, %153 : vector<4x4x128xf32>
    %155 = vector.extract_strided_slice %135 {offsets = [0, 640], sizes = [48, 128], strides = [1, 1]} : vector<48x1152xf32> to vector<48x128xf32>
    %156 = vector.shape_cast %155 : vector<48x128xf32> to vector<6x8x128xf32>
    %157 = vector.extract_strided_slice %156 {offsets = [1, 2, 0], sizes = [4, 4, 128], strides = [1, 1, 1]} : vector<6x8x128xf32> to vector<4x4x128xf32>
    %158 = arith.addf %154, %157 : vector<4x4x128xf32>
    %159 = vector.extract_strided_slice %135 {offsets = [0, 768], sizes = [48, 128], strides = [1, 1]} : vector<48x1152xf32> to vector<48x128xf32>
    %160 = vector.shape_cast %159 : vector<48x128xf32> to vector<6x8x128xf32>
    %161 = vector.extract_strided_slice %160 {offsets = [2, 0, 0], sizes = [4, 4, 128], strides = [1, 1, 1]} : vector<6x8x128xf32> to vector<4x4x128xf32>
    %162 = arith.addf %158, %161 : vector<4x4x128xf32>
    %163 = vector.extract_strided_slice %135 {offsets = [0, 896], sizes = [48, 128], strides = [1, 1]} : vector<48x1152xf32> to vector<48x128xf32>
    %164 = vector.shape_cast %163 : vector<48x128xf32> to vector<6x8x128xf32>
    %165 = vector.extract_strided_slice %164 {offsets = [2, 1, 0], sizes = [4, 4, 128], strides = [1, 1, 1]} : vector<6x8x128xf32> to vector<4x4x128xf32>
    %166 = arith.addf %162, %165 : vector<4x4x128xf32>
    %167 = vector.extract_strided_slice %135 {offsets = [0, 1024], sizes = [48, 128], strides = [1, 1]} : vector<48x1152xf32> to vector<48x128xf32>
    %168 = vector.shape_cast %167 : vector<48x128xf32> to vector<6x8x128xf32>
    %169 = vector.extract_strided_slice %168 {offsets = [2, 2, 0], sizes = [4, 4, 128], strides = [1, 1, 1]} : vector<6x8x128xf32> to vector<4x4x128xf32>
    %170 = arith.addf %166, %169 : vector<4x4x128xf32>
    %c0_51 = arith.constant 0 : index
    %c0_52 = arith.constant 0 : index
    %171 = vector.load %arg7[%c0_51, %c0_52] : memref<1x128xf32, #tpu.memory_space<vmem>>, vector<1x128xf32>
    %172 = vector.shape_cast %171 : vector<1x128xf32> to vector<1x1x128xf32>
    %173 = vector.broadcast %172 : vector<1x1x128xf32> to vector<4x4x128xf32>
    %174 = arith.addf %170, %173 : vector<4x4x128xf32>
    %175 = arith.addf %174, %69 : vector<4x4x128xf32>
    %cst_53 = arith.constant 0.000000e+00 : f32
    %176 = vector.broadcast %cst_53 : f32 to vector<4x4x128xf32>
    %177 = arith.maximumf %175, %176 : vector<4x4x128xf32>
    %178 = vector.extract_strided_slice %177 {offsets = [0, 0, 0], sizes = [1, 4, 128], strides = [1, 1, 1]} : vector<4x4x128xf32> to vector<1x4x128xf32>
    %179 = vector.shape_cast %178 : vector<1x4x128xf32> to vector<4x128xf32>
    %c0_54 = arith.constant 0 : index
    %c0_55 = arith.constant 0 : index
    %180 = vector.load %arg10[%c0_54, %c0_55] : memref<16x128xf32, #tpu.memory_space<vmem>>, vector<4x128xf32>
    tpu.vector_store %arg10[%c0_54, %c0_55], %179 {strides = array<i32>} : memref<16x128xf32, #tpu.memory_space<vmem>>, vector<4x128xf32>,
    %181 = vector.extract_strided_slice %177 {offsets = [1, 0, 0], sizes = [1, 4, 128], strides = [1, 1, 1]} : vector<4x4x128xf32> to vector<1x4x128xf32>
    %182 = vector.shape_cast %181 : vector<1x4x128xf32> to vector<4x128xf32>
    %c4_56 = arith.constant 4 : index
    %c0_57 = arith.constant 0 : index
    %183 = vector.load %arg10[%c4_56, %c0_57] : memref<16x128xf32, #tpu.memory_space<vmem>>, vector<4x128xf32>
    tpu.vector_store %arg10[%c4_56, %c0_57], %182 {strides = array<i32>} : memref<16x128xf32, #tpu.memory_space<vmem>>, vector<4x128xf32>,
    %184 = vector.extract_strided_slice %177 {offsets = [2, 0, 0], sizes = [1, 4, 128], strides = [1, 1, 1]} : vector<4x4x128xf32> to vector<1x4x128xf32>
    %185 = vector.shape_cast %184 : vector<1x4x128xf32> to vector<4x128xf32>
    %c8_58 = arith.constant 8 : index
    %c0_59 = arith.constant 0 : index
    %186 = vector.load %arg10[%c8_58, %c0_59] : memref<16x128xf32, #tpu.memory_space<vmem>>, vector<4x128xf32>
    tpu.vector_store %arg10[%c8_58, %c0_59], %185 {strides = array<i32>} : memref<16x128xf32, #tpu.memory_space<vmem>>, vector<4x128xf32>,
    %187 = vector.extract_strided_slice %177 {offsets = [3, 0, 0], sizes = [1, 4, 128], strides = [1, 1, 1]} : vector<4x4x128xf32> to vector<1x4x128xf32>
    %188 = vector.shape_cast %187 : vector<1x4x128xf32> to vector<4x128xf32>
    %c12_60 = arith.constant 12 : index
    %c0_61 = arith.constant 0 : index
    %189 = vector.load %arg10[%c12_60, %c0_61] : memref<16x128xf32, #tpu.memory_space<vmem>>, vector<4x128xf32>
    tpu.vector_store %arg10[%c12_60, %c0_61], %188 {strides = array<i32>} : memref<16x128xf32, #tpu.memory_space<vmem>>, vector<4x128xf32>,
    return
  }
  func.func @transform_0(%arg0: i32) -> (i32, i32) {
    %c0_i32 = arith.constant 0 : i32
    %c0_i32_0 = arith.constant 0 : i32
    return %arg0, %c0_i32 : i32, i32
  }
  func.func @transform_1(%arg0: i32) -> (i32, i32) {
    %c0_i32 = arith.constant 0 : i32
    %c0_i32_0 = arith.constant 0 : i32
    %c0_i32_1 = arith.constant 0 : i32
    return %c0_i32, %c0_i32_0 : i32, i32
  }
  func.func @transform_2(%arg0: i32) -> (i32, i32) {
    %c0_i32 = arith.constant 0 : i32
    %c0_i32_0 = arith.constant 0 : i32
    %c0_i32_1 = arith.constant 0 : i32
    return %c0_i32, %c0_i32_0 : i32, i32
  }
  func.func @transform_3(%arg0: i32) -> (i32, i32) {
    %c0_i32 = arith.constant 0 : i32
    %c0_i32_0 = arith.constant 0 : i32
    %c0_i32_1 = arith.constant 0 : i32
    return %c0_i32, %c0_i32_0 : i32, i32
  }
  func.func @transform_4(%arg0: i32) -> (i32, i32) {
    %c0_i32 = arith.constant 0 : i32
    %c0_i32_0 = arith.constant 0 : i32
    %c0_i32_1 = arith.constant 0 : i32
    return %c0_i32, %c0_i32_0 : i32, i32
  }
  func.func @transform_5(%arg0: i32) -> (i32, i32) {
    %c0_i32 = arith.constant 0 : i32
    %c0_i32_0 = arith.constant 0 : i32
    %c0_i32_1 = arith.constant 0 : i32
    return %c0_i32, %c0_i32_0 : i32, i32
  }
  func.func @transform_6(%arg0: i32) -> (i32, i32) {
    %c0_i32 = arith.constant 0 : i32
    %c0_i32_0 = arith.constant 0 : i32
    %c0_i32_1 = arith.constant 0 : i32
    return %c0_i32, %c0_i32_0 : i32, i32
  }
  func.func @transform_7(%arg0: i32) -> (i32, i32) {
    %c0_i32 = arith.constant 0 : i32
    %c0_i32_0 = arith.constant 0 : i32
    return %arg0, %c0_i32 : i32, i32
  }
  func.func @transform_8(%arg0: i32) -> (i32, i32) {
    %c0_i32 = arith.constant 0 : i32
    %c0_i32_0 = arith.constant 0 : i32
    return %arg0, %c0_i32 : i32, i32
  }
  func.func @transform_9(%arg0: i32) -> (i32, i32) {
    %c0_i32 = arith.constant 0 : i32
    %c0_i32_0 = arith.constant 0 : i32
    return %arg0, %c0_i32 : i32, i32
  }
}

</mosaic_0001>

<llo_original>
// kernel: tpu_custom_call.1
$region0: #{tpu_custom_call.1}
  #allocation0 [shape = 'u32[]', space=smem, size = 0x4, offset = 0x4, fixed_abs, tag = 'smem constant byte address 0x4 - core index']
  #allocation1 [shape = 'u32[144,128]{1,0:T(1,128)}', space=vmem, size = 0x12000, scoped, tag = 'internal scratch']
  #allocation2 [shape = 'f32[6,8,128]{2,1,0:T(8,128)}', space=vmem, size = 0x6000, scoped, tag = 'scratch operand']
  #allocation3 [shape = 'f32[6,8,128]{2,1,0:T(8,128)}', space=vmem, size = 0x6000, scoped, tag = 'scratch operand']
  %s0 = inlined_call_operand.hbm [shape: f32[128,256], index: 0, kind: input, shape index: {}]
  %s1 = inlined_call_operand.hbm [shape: bf16[256,128], index: 1, kind: input, shape index: {}]
  %s2 = inlined_call_operand.vmem [shape: f32[1,128], index: 2, kind: input, shape index: {}]
  %s3 = inlined_call_operand.hbm [shape: bf16[128,1152], index: 3, kind: input, shape index: {}]
  %s4 = inlined_call_operand.vmem [shape: f32[1,128], index: 4, kind: input, shape index: {}]
  %s5 = inlined_call_operand.hbm [shape: bf16[128,1152], index: 5, kind: input, shape index: {}]
  %s6 = inlined_call_operand.vmem [shape: f32[1,128], index: 6, kind: input, shape index: {}]
  %s7 = inlined_call_operand.hbm [shape: f32[128,128], index: 7, kind: output, shape index: {0}]
  %s8 = inlined_call_operand.hbm [shape: f32[32,128], index: 8, kind: output, shape index: {1}]
  %s9 = inlined_call_operand.hbm [shape: f32[32,128], index: 9, kind: output, shape index: {2}]
  %10 = xla_tuple %s7, %s8, %s9
  %s11 = sld [smem:[#allocation0]]
  $region93: #{tpu_custom_call.1} parent=0
    _
  %s13 = ssub.s32 1, %s11
  %s14 = scalar_select 0, %s13, %s11
  $region1: #{tpu_custom_call.1} parent=0
    #allocation4 [shape = 'u8[131072]{0}', space=vmem, size = 0x20000, scoped, tag = 'input window, operand 0']
    #allocation5 [shape = 's32[2]{0}', space=sflag, size = 0x8, scoped, tag = 'scoped memory for tpu_custom_call.1']
    #allocation6 [shape = 's32[2]{0}', space=sflag, size = 0x8, scoped, tag = 'scoped memory for tpu_custom_call.1']
    #allocation7 [shape = 'u8[65536]{0}', space=vmem, size = 0x10000, scoped, tag = 'input window, operand 1, single buffered']
    #allocation8 [shape = 's32[1]{0}', space=sflag, size = 0x4, scoped, tag = 'scoped memory for tpu_custom_call.1']
    #allocation9 [shape = 'u8[294912]{0}', space=vmem, size = 0x48000, scoped, tag = 'input window, operand 3, single buffered']
    #allocation10 [shape = 'u8[294912]{0}', space=vmem, size = 0x48000, scoped, tag = 'input window, operand 5, single buffered']
    #allocation11 [shape = 's32[1]{0}', space=sflag, size = 0x4, scoped, tag = 'scoped memory for tpu_custom_call.1']
    #allocation12 [shape = 'u8[65536]{0}', space=vmem, size = 0x10000, scoped, tag = 'output window, operand 0']
    #allocation13 [shape = 'u8[16384]{0}', space=vmem, size = 0x4000, scoped, tag = 'output window, operand 1']
    #allocation14 [shape = 's32[2]{0}', space=sflag, size = 0x8, scoped, tag = 'scoped memory for tpu_custom_call.1']
    #allocation15 [shape = 'u8[16384]{0}', space=vmem, size = 0x4000, scoped, tag = 'output window, operand 2']
    %15 = vsyncpa [#allocation5], 0
    %s16 = scalar_lea.sflag [#allocation5], 1
    %17 = vsyncpa %s16, 0
    %18 = vsyncpa [#allocation8], 0
    %19 = vsyncpa [#allocation11], 0
    %20 = vsyncpa [#allocation6], 0
    %s21 = scalar_lea.sflag [#allocation6], 1
    %22 = vsyncpa %s21, 0
    %23 = vsyncpa [#allocation14], 0
    %s24 = scalar_lea.sflag [#allocation14], 1
    %25 = vsyncpa %s24, 0
    loop: start=0, step=1, limit=4
    $region2: #{tpu_custom_call.1} parent=1 // loop_pre_header
      _
    $region3: #{tpu_custom_call.1} parent=1 // loop_header
      %s27 = sphi 0, %s31
      %p28 = scmp.ge.s32.totalorder %s27, 4
      %s37 = sphi 0, %s39
      %s40 = sphi 0, %s37
      %s41 = sphi 0, %s40
      %s57 = sphi 0, %s41
      %s61 = sphi 0, %s61
      %s63 = sphi 0, %s61
      %s64 = sphi 0, %s63
      %s78 = sphi 0, %s64
      %s82 = sphi 0, %s82
      %s84 = sphi 0, %s82
      %s85 = sphi 0, %s84
      %s99 = sphi 0, %s85
      %s103 = sphi 0, %s103
      %s105 = sphi 0, %s103
      %s106 = sphi 0, %s105
      %s120 = sphi 0, %s106
      %s124 = sphi 0, %s124
      %s126 = sphi 0, %s124
      %s127 = sphi 0, %s126
      %s141 = sphi 0, %s127
      %s145 = sphi 0, %s145
      %s147 = sphi 0, %s145
      %s148 = sphi 0, %s147
      %s162 = sphi 0, %s148
      %s166 = sphi 0, %s166
      %s168 = sphi 0, %s166
      %s169 = sphi 0, %s168
      %s183 = sphi 0, %s169
      %s189 = sphi 0, %s191
      %s192 = sphi 0, %s189
      %s193 = sphi 0, %s192
      %s209 = sphi 0, %s193
      %s215 = sphi 0, %s217
      %s218 = sphi 0, %s215
      %s219 = sphi 0, %s218
      %s235 = sphi 0, %s219
      %s241 = sphi 0, %s243
      %s244 = sphi 0, %s241
      %s245 = sphi 0, %s244
      %s261 = sphi 0, %s245
    $region4: #{tpu_custom_call.1} parent=1 // loop_header_branch
      %30 = sbr.rel (%p28) target = $region8
    $region5: #{tpu_custom_call.1} parent=1 // loop_body
      %s32 = ssub.s32 %s27, 1
      %s33 = ssub.s32 %s27, 2
      %s34 = sadd.s32 %s27, 1
      %s35 = ssub.s32 %s27, %s34
      %p36 = scmp.eq.s32.totalorder %s35, 0
      %s38 = sadd.s32 %s37, 1
      %s39 = scalar_select %p36, %s37, %s38
      %p42 = pneg %p36
      %p43 = scmp.eq.s32.totalorder %s27, 1
      %p44 = por %p42, %p43
      %p45 = scmp.ne.s32.totalorder %s37, %s40
      %p46 = scmp.eq.s32.totalorder %s27, 0
      %p47 = por %p45, %p46
      %p48 = scmp.ne.s32.totalorder %s37, %s40
      %p49 = scmp.eq.s32.totalorder %s32, 1
      %p50 = por %p48, %p49
      %p51 = scmp.ne.s32.totalorder %s40, %s41
      %p52 = scmp.eq.s32.totalorder %s32, 0
      %p53 = por %p51, %p52
      %p54 = scmp.ne.s32.totalorder %s40, %s41
      %p55 = scmp.eq.s32.totalorder %s33, 1
      %p56 = por %p54, %p55
      %p58 = scmp.ne.s32.totalorder %s41, %s57
      %p59 = scmp.eq.s32.totalorder %s33, 0
      %p60 = por %p58, %p59
      %s62 = sadd.s32 %s61, 1
      %p65 = scmp.eq.s32.totalorder %s27, 1
      %p66 = scmp.ne.s32.totalorder %s61, %s63
      %p67 = scmp.eq.s32.totalorder %s27, 0
      %p68 = por %p66, %p67
      %p69 = scmp.ne.s32.totalorder %s61, %s63
      %p70 = scmp.eq.s32.totalorder %s32, 1
      %p71 = por %p69, %p70
      %p72 = scmp.ne.s32.totalorder %s63, %s64
      %p73 = scmp.eq.s32.totalorder %s32, 0
      %p74 = por %p72, %p73
      %p75 = scmp.ne.s32.totalorder %s63, %s64
      %p76 = scmp.eq.s32.totalorder %s33, 1
      %p77 = por %p75, %p76
      %p79 = scmp.ne.s32.totalorder %s64, %s78
      %p80 = scmp.eq.s32.totalorder %s33, 0
      %p81 = por %p79, %p80
      %s83 = sadd.s32 %s82, 1
      %p86 = scmp.eq.s32.totalorder %s27, 1
      %p87 = scmp.ne.s32.totalorder %s82, %s84
      %p88 = scmp.eq.s32.totalorder %s27, 0
      %p89 = por %p87, %p88
      %p90 = scmp.ne.s32.totalorder %s82, %s84
      %p91 = scmp.eq.s32.totalorder %s32, 1
      %p92 = por %p90, %p91
      %p93 = scmp.ne.s32.totalorder %s84, %s85
      %p94 = scmp.eq.s32.totalorder %s32, 0
      %p95 = por %p93, %p94
      %p96 = scmp.ne.s32.totalorder %s84, %s85
      %p97 = scmp.eq.s32.totalorder %s33, 1
      %p98 = por %p96, %p97
      %p100 = scmp.ne.s32.totalorder %s85, %s99
      %p101 = scmp.eq.s32.totalorder %s33, 0
      %p102 = por %p100, %p101
      %s104 = sadd.s32 %s103, 1
      %p107 = scmp.eq.s32.totalorder %s27, 1
      %p108 = scmp.ne.s32.totalorder %s103, %s105
      %p109 = scmp.eq.s32.totalorder %s27, 0
      %p110 = por %p108, %p109
      %p111 = scmp.ne.s32.totalorder %s103, %s105
      %p112 = scmp.eq.s32.totalorder %s32, 1
      %p113 = por %p111, %p112
      %p114 = scmp.ne.s32.totalorder %s105, %s106
      %p115 = scmp.eq.s32.totalorder %s32, 0
      %p116 = por %p114, %p115
      %p117 = scmp.ne.s32.totalorder %s105, %s106
      %p118 = scmp.eq.s32.totalorder %s33, 1
      %p119 = por %p117, %p118
      %p121 = scmp.ne.s32.totalorder %s106, %s120
      %p122 = scmp.eq.s32.totalorder %s33, 0
      %p123 = por %p121, %p122
      %s125 = sadd.s32 %s124, 1
      %p128 = scmp.eq.s32.totalorder %s27, 1
      %p129 = scmp.ne.s32.totalorder %s124, %s126
      %p130 = scmp.eq.s32.totalorder %s27, 0
      %p131 = por %p129, %p130
      %p132 = scmp.ne.s32.totalorder %s124, %s126
      %p133 = scmp.eq.s32.totalorder %s32, 1
      %p134 = por %p132, %p133
      %p135 = scmp.ne.s32.totalorder %s126, %s127
      %p136 = scmp.eq.s32.totalorder %s32, 0
      %p137 = por %p135, %p136
      %p138 = scmp.ne.s32.totalorder %s126, %s127
      %p139 = scmp.eq.s32.totalorder %s33, 1
      %p140 = por %p138, %p139
      %p142 = scmp.ne.s32.totalorder %s127, %s141
      %p143 = scmp.eq.s32.totalorder %s33, 0
      %p144 = por %p142, %p143
      %s146 = sadd.s32 %s145, 1
      %p149 = scmp.eq.s32.totalorder %s27, 1
      %p150 = scmp.ne.s32.totalorder %s145, %s147
      %p151 = scmp.eq.s32.totalorder %s27, 0
      %p152 = por %p150, %p151
      %p153 = scmp.ne.s32.totalorder %s145, %s147
      %p154 = scmp.eq.s32.totalorder %s32, 1
      %p155 = por %p153, %p154
      %p156 = scmp.ne.s32.totalorder %s147, %s148
      %p157 = scmp.eq.s32.totalorder %s32, 0
      %p158 = por %p156, %p157
      %p159 = scmp.ne.s32.totalorder %s147, %s148
      %p160 = scmp.eq.s32.totalorder %s33, 1
      %p161 = por %p159, %p160
      %p163 = scmp.ne.s32.totalorder %s148, %s162
      %p164 = scmp.eq.s32.totalorder %s33, 0
      %p165 = por %p163, %p164
      %s167 = sadd.s32 %s166, 1
      %p170 = scmp.eq.s32.totalorder %s27, 1
      %p171 = scmp.ne.s32.totalorder %s166, %s168
      %p172 = scmp.eq.s32.totalorder %s27, 0
      %p173 = por %p171, %p172
      %p174 = scmp.ne.s32.totalorder %s166, %s168
      %p175 = scmp.eq.s32.totalorder %s32, 1
      %p176 = por %p174, %p175
      %p177 = scmp.ne.s32.totalorder %s168, %s169
      %p178 = scmp.eq.s32.totalorder %s32, 0
      %p179 = por %p177, %p178
      %p180 = scmp.ne.s32.totalorder %s168, %s169
      %p181 = scmp.eq.s32.totalorder %s33, 1
      %p182 = por %p180, %p181
      %p184 = scmp.ne.s32.totalorder %s169, %s183
      %p185 = scmp.eq.s32.totalorder %s33, 0
      %p186 = por %p184, %p185
      %s187 = ssub.s32 %s27, %s34
      %p188 = scmp.eq.s32.totalorder %s187, 0
      %s190 = sadd.s32 %s189, 1
      %s191 = scalar_select %p188, %s189, %s190
      %p194 = pneg %p188
      %p195 = scmp.eq.s32.totalorder %s27, 1
      %p196 = por %p194, %p195
      %p197 = scmp.ne.s32.totalorder %s189, %s192
      %p198 = scmp.eq.s32.totalorder %s27, 0
      %p199 = por %p197, %p198
      %p200 = scmp.ne.s32.totalorder %s189, %s192
      %p201 = scmp.eq.s32.totalorder %s32, 1
      %p202 = por %p200, %p201
      %p203 = scmp.ne.s32.totalorder %s192, %s193
      %p204 = scmp.eq.s32.totalorder %s32, 0
      %p205 = por %p203, %p204
      %p206 = scmp.ne.s32.totalorder %s192, %s193
      %p207 = scmp.eq.s32.totalorder %s33, 1
      %p208 = por %p206, %p207
      %p210 = scmp.ne.s32.totalorder %s193, %s209
      %p211 = scmp.eq.s32.totalorder %s33, 0
      %p212 = por %p210, %p211
      %s213 = ssub.s32 %s27, %s34
      %p214 = scmp.eq.s32.totalorder %s213, 0
      %s216 = sadd.s32 %s215, 1
      %s217 = scalar_select %p214, %s215, %s216
      %p220 = pneg %p214
      %p221 = scmp.eq.s32.totalorder %s27, 1
      %p222 = por %p220, %p221
      %p223 = scmp.ne.s32.totalorder %s215, %s218
      %p224 = scmp.eq.s32.totalorder %s27, 0
      %p225 = por %p223, %p224
      %p226 = scmp.ne.s32.totalorder %s215, %s218
      %p227 = scmp.eq.s32.totalorder %s32, 1
      %p228 = por %p226, %p227
      %p229 = scmp.ne.s32.totalorder %s218, %s219
      %p230 = scmp.eq.s32.totalorder %s32, 0
      %p231 = por %p229, %p230
      %p232 = scmp.ne.s32.totalorder %s218, %s219
      %p233 = scmp.eq.s32.totalorder %s33, 1
      %p234 = por %p232, %p233
      %p236 = scmp.ne.s32.totalorder %s219, %s235
      %p237 = scmp.eq.s32.totalorder %s33, 0
      %p238 = por %p236, %p237
      %s239 = ssub.s32 %s27, %s34
      %p240 = scmp.eq.s32.totalorder %s239, 0
      %s242 = sadd.s32 %s241, 1
      %s243 = scalar_select %p240, %s241, %s242
      %p246 = pneg %p240
      %p247 = scmp.eq.s32.totalorder %s27, 1
      %p248 = por %p246, %p247
      %p249 = scmp.ne.s32.totalorder %s241, %s244
      %p250 = scmp.eq.s32.totalorder %s27, 0
      %p251 = por %p249, %p250
      %p252 = scmp.ne.s32.totalorder %s241, %s244
      %p253 = scmp.eq.s32.totalorder %s32, 1
      %p254 = por %p252, %p253
      %p255 = scmp.ne.s32.totalorder %s244, %s245
      %p256 = scmp.eq.s32.totalorder %s32, 0
      %p257 = por %p255, %p256
      %p258 = scmp.ne.s32.totalorder %s244, %s245
      %p259 = scmp.eq.s32.totalorder %s33, 1
      %p260 = por %p258, %p259
      %p262 = scmp.ne.s32.totalorder %s245, %s261
      %p263 = scmp.eq.s32.totalorder %s33, 0
      %p264 = por %p262, %p263
      %p265 = scmp.le.s32.totalorder 1, %s27
      %p266 = scmp.lt.s32.totalorder %s27, 3
      %p267 = pnand %p265, %p266
      %p268 = pneg %p267
      // Predicated region
      $region9: #{tpu_custom_call.1} parent=5 // pred_check
        _
      $region10: #{tpu_custom_call.1} parent=5 // pred_check_branch
        %270 = sbr.rel (%p267) target = $region12
      $region11: #{tpu_custom_call.1} parent=5 // pred_region
        %s271 = ssub.s32 %s27, 1
        // Predicated region
        $region13: #{tpu_custom_call.1} parent=11 // pred_check
          %p272 = pneg %p74
        $region14: #{tpu_custom_call.1} parent=11 // pred_check_branch
          %274 = sbr.rel (%p272) target = $region16
        $region15: #{tpu_custom_call.1} parent=11 // pred_region
          %s276 = ssub.s32 2048, 2048
          %277 = vsyncadd [#allocation8], %s276
          %s278 = sshll.u32 [#allocation7], 4
          %s279 = int_to_ptr.vmem [resolvable:$true] %s278
          %284 = dma.hbm_to_vmem [thread:$0]  %s1, 2048, %s279, [#allocation8], 64, 64, 4
        $region16: #{tpu_custom_call.1} parent=11 // pred_fallthru
          _
        // Predicated region
        $region17: #{tpu_custom_call.1} parent=11 // pred_check
          %p285 = pneg %p95
        $region18: #{tpu_custom_call.1} parent=11 // pred_check_branch
          %287 = sbr.rel (%p285) target = $region20
        $region19: #{tpu_custom_call.1} parent=11 // pred_region
          _
        $region20: #{tpu_custom_call.1} parent=11 // pred_fallthru
          _
        // Predicated region
        $region21: #{tpu_custom_call.1} parent=11 // pred_check
          %p288 = pneg %p116
        $region22: #{tpu_custom_call.1} parent=11 // pred_check_branch
          %290 = sbr.rel (%p288) target = $region24
        $region23: #{tpu_custom_call.1} parent=11 // pred_region
          %s292 = ssub.s32 9216, 9216
          %293 = vsyncadd [#allocation8], %s292
          %s294 = sshll.u32 [#allocation9], 4
          %s295 = int_to_ptr.vmem [resolvable:$true] %s294
          %300 = dma.hbm_to_vmem [thread:$0]  %s3, 9216, %s295, [#allocation8], 576, 576, 36
        $region24: #{tpu_custom_call.1} parent=11 // pred_fallthru
          _
        // Predicated region
        $region25: #{tpu_custom_call.1} parent=11 // pred_check
          %p301 = pneg %p137
        $region26: #{tpu_custom_call.1} parent=11 // pred_check_branch
          %303 = sbr.rel (%p301) target = $region28
        $region27: #{tpu_custom_call.1} parent=11 // pred_region
          _
        $region28: #{tpu_custom_call.1} parent=11 // pred_fallthru
          _
        // Predicated region
        $region29: #{tpu_custom_call.1} parent=11 // pred_check
          %p304 = pneg %p158
        $region30: #{tpu_custom_call.1} parent=11 // pred_check_branch
          %306 = sbr.rel (%p304) target = $region32
        $region31: #{tpu_custom_call.1} parent=11 // pred_region
          %s308 = ssub.s32 9216, 9216
          %309 = vsyncadd [#allocation11], %s308
          %s310 = sshll.u32 [#allocation10], 4
          %s311 = int_to_ptr.vmem [resolvable:$true] %s310
          %316 = dma.hbm_to_vmem [thread:$0]  %s5, 9216, %s311, [#allocation11], 576, 576, 36
        $region32: #{tpu_custom_call.1} parent=11 // pred_fallthru
          _
        // Predicated region
        $region33: #{tpu_custom_call.1} parent=11 // pred_check
          %p317 = pneg %p179
        $region34: #{tpu_custom_call.1} parent=11 // pred_check_branch
          %319 = sbr.rel (%p317) target = $region36
        $region35: #{tpu_custom_call.1} parent=11 // pred_region
          _
        $region36: #{tpu_custom_call.1} parent=11 // pred_fallthru
          _
      $region12: #{tpu_custom_call.1} parent=5 // pred_fallthru
        _
      %p320 = scmp.lt.s32.totalorder %s27, 2
      // Predicated region
      $region37: #{tpu_custom_call.1} parent=5 // pred_check
        %p321 = pneg %p320
      $region38: #{tpu_custom_call.1} parent=5 // pred_check_branch
        %323 = sbr.rel (%p321) target = $region40
      $region39: #{tpu_custom_call.1} parent=5 // pred_region
        // Predicated region
        $region41: #{tpu_custom_call.1} parent=39 // pred_check
          %p324 = pneg %p47
        $region42: #{tpu_custom_call.1} parent=39 // pred_check_branch
          %326 = sbr.rel (%p324) target = $region44
        $region43: #{tpu_custom_call.1} parent=39 // pred_region
          %s327 = sand.u32 %s37, 1
          %s328 = scalar_lea.sflag [#allocation5], %s327
          %s329 = sand.u32 %s37, 1
          %s330 = smul.addr %s329, 128
          %s331 = scalar_lea.vmem [#allocation4], %s330
          %s332 = smul.u32 8, %s27
          %s334 = ssub.s32 2048, 2048
          %335 = vsyncadd %s328, %s334
          %s336 = smul.addr %s332, 2
          %s337 = smul.addr %s336, 128
          %s338 = scalar_lea.hbm %s0, %s337
          %s339 = sshll.u32 %s331, 4
          %s340 = int_to_ptr.vmem [resolvable:$true] %s339
          %345 = dma.hbm_to_vmem [thread:$0]  %s338, 2048, %s340, %s328, 256, 256, 16
        $region44: #{tpu_custom_call.1} parent=39 // pred_fallthru
          _
      $region40: #{tpu_custom_call.1} parent=5 // pred_fallthru
        _
      %p346 = scmp.le.s32.totalorder 1, %s27
      %p347 = scmp.lt.s32.totalorder %s27, 3
      %p348 = pnand %p346, %p347
      %p349 = pneg %p348
      // Predicated region
      $region45: #{tpu_custom_call.1} parent=5 // pred_check
        _
      $region46: #{tpu_custom_call.1} parent=5 // pred_check_branch
        %351 = sbr.rel (%p348) target = $region48
      $region47: #{tpu_custom_call.1} parent=5 // pred_region
        %s352 = ssub.s32 %s27, 1
        %s353 = sand.u32 %s40, 1
        %s354 = scalar_lea.sflag [#allocation5], %s353
        %s355 = sand.u32 %s40, 1
        %s356 = smul.addr %s355, 128
        %s357 = scalar_lea.vmem [#allocation4], %s356
        // Predicated region
        $region49: #{tpu_custom_call.1} parent=47 // pred_check
          %p358 = pneg %p53
        $region50: #{tpu_custom_call.1} parent=47 // pred_check_branch
          %360 = sbr.rel (%p358) target = $region52
        $region51: #{tpu_custom_call.1} parent=47 // pred_region
          %361 = dma.done %s354, 2048
        $region52: #{tpu_custom_call.1} parent=47 // pred_fallthru
          _
        // Predicated region
        $region53: #{tpu_custom_call.1} parent=47 // pred_check
          %p362 = pneg %p74
        $region54: #{tpu_custom_call.1} parent=47 // pred_check_branch
          %364 = sbr.rel (%p362) target = $region56
        $region55: #{tpu_custom_call.1} parent=47 // pred_region
          %365 = dma.done [#allocation8], 2048
        $region56: #{tpu_custom_call.1} parent=47 // pred_fallthru
          _
        // Predicated region
        $region57: #{tpu_custom_call.1} parent=47 // pred_check
          %p366 = pneg %p116
        $region58: #{tpu_custom_call.1} parent=47 // pred_check_branch
          %368 = sbr.rel (%p366) target = $region60
        $region59: #{tpu_custom_call.1} parent=47 // pred_region
          %369 = dma.done [#allocation8], 9216
        $region60: #{tpu_custom_call.1} parent=47 // pred_fallthru
          _
        // Predicated region
        $region61: #{tpu_custom_call.1} parent=47 // pred_check
          %p370 = pneg %p158
        $region62: #{tpu_custom_call.1} parent=47 // pred_check_branch
          %372 = sbr.rel (%p370) target = $region64
        $region63: #{tpu_custom_call.1} parent=47 // pred_region
          %373 = dma.done [#allocation11], 9216
        $region64: #{tpu_custom_call.1} parent=47 // pred_fallthru
          _
        %s374 = sand.u32 %s40, 1
        %s375 = scalar_lea.sflag [#allocation5], %s374
        %s376 = sand.u32 %s40, 1
        %s377 = smul.addr %s376, 128
        %s378 = scalar_lea.vmem [#allocation4], %s377
        %p379 = pneg %p53
        %p380 = pneg %p50
        %p381 = pneg %p74
        %p382 = pneg %p71
        %p383 = pneg %p95
        %p384 = pneg %p92
        %p385 = pneg %p116
        %p386 = pneg %p113
        %p387 = pneg %p137
        %p388 = pneg %p134
        %p389 = pneg %p158
        %p390 = pneg %p155
        %p391 = pneg %p179
        %p392 = pneg %p176
        %p393 = pneg %p205
        %p394 = pneg %p202
        %s395 = sand.u32 %s192, 1
        %s396 = scalar_lea.sflag [#allocation6], %s395
        %s397 = sand.u32 %s192, 1
        %s398 = smul.addr %s397, 64
        %s399 = scalar_lea.vmem [#allocation12], %s398
        %p400 = pneg %p231
        %p401 = pneg %p228
        %s402 = sand.u32 %s32, 1
        %s403 = scalar_lea.sflag [#allocation14], %s402
        %s404 = sand.u32 %s218, 1
        %s405 = smul.addr %s404, 16
        %s406 = scalar_lea.vmem [#allocation13], %s405
        %p407 = pneg %p257
        %p408 = pneg %p254
        %s409 = sand.u32 %s32, 1
        %s410 = scalar_lea.sflag [#allocation14], %s409
        %s411 = sand.u32 %s244, 1
        %s412 = smul.addr %s411, 16
        %s413 = scalar_lea.vmem [#allocation15], %s412
        %s414 = smul.u32 8, %s32
        %s415 = smul.u32 8, %s32
        %s416 = smul.u32 2, %s32
        %s417 = smul.u32 2, %s32
        %v419 = vld [vmem:[%s357] sm:$0xff]
        %v420 = vld [vmem:[%s357 + $0x8] sm:$0xff]
        %v421 = vld [vmem:[%s357 + $0x10] sm:$0xff]
        %v422 = vld [vmem:[%s357 + $0x18] sm:$0xff]
        %v423 = vld [vmem:[%s357 + $0x20] sm:$0xff]
        %v424 = vld [vmem:[%s357 + $0x28] sm:$0xff]
        %v425 = vld [vmem:[%s357 + $0x30] sm:$0xff]
        %v426 = vld [vmem:[%s357 + $0x38] sm:$0xff]
        %v427 = vld [vmem:[%s357 + $0x40] sm:$0xff]
        %v428 = vld [vmem:[%s357 + $0x48] sm:$0xff]
        %v429 = vld [vmem:[%s357 + $0x50] sm:$0xff]
        %v430 = vld [vmem:[%s357 + $0x58] sm:$0xff]
        %v431 = vld [vmem:[%s357 + $0x60] sm:$0xff]
        %v432 = vld [vmem:[%s357 + $0x68] sm:$0xff]
        %v433 = vld [vmem:[%s357 + $0x70] sm:$0xff]
        %v434 = vld [vmem:[%s357 + $0x78] sm:$0xff]
        %v435 = vpack.c.bf16 %v421, %v419
        %v436 = vpack.c.bf16 %v422, %v420
        %v437 = vpack.c.bf16 %v425, %v423
        %v438 = vpack.c.bf16 %v426, %v424
        %v439 = vpack.c.bf16 %v429, %v427
        %v440 = vpack.c.bf16 %v430, %v428
        %v441 = vpack.c.bf16 %v433, %v431
        %v442 = vpack.c.bf16 %v434, %v432
        %v443 = vld [vmem:[#allocation7] sm:$0xf]
        %v444 = vld [vmem:[#allocation7 + $0x4] sm:$0xf]
        %v445 = vld [vmem:[#allocation7 + $0x8] sm:$0xf]
        %v446 = vld [vmem:[#allocation7 + $0xc] sm:$0xf]
        %v447 = vld [vmem:[#allocation7 + $0x10] sm:$0xf]
        %v448 = vld [vmem:[#allocation7 + $0x14] sm:$0xf]
        %v449 = vld [vmem:[#allocation7 + $0x18] sm:$0xf]
        %v450 = vld [vmem:[#allocation7 + $0x1c] sm:$0xf]
        %v451 = vld [vmem:[#allocation7 + $0x20] sm:$0xf]
        %v452 = vld [vmem:[#allocation7 + $0x24] sm:$0xf]
        %v453 = vld [vmem:[#allocation7 + $0x28] sm:$0xf]
        %v454 = vld [vmem:[#allocation7 + $0x2c] sm:$0xf]
        %v455 = vld [vmem:[#allocation7 + $0x30] sm:$0xf]
        %v456 = vld [vmem:[#allocation7 + $0x34] sm:$0xf]
        %v457 = vld [vmem:[#allocation7 + $0x38] sm:$0xf]
        %v458 = vld [vmem:[#allocation7 + $0x3c] sm:$0xf]
        %v459 = vld [vmem:[#allocation7 + $0x40] sm:$0xf]
        %v460 = vld [vmem:[#allocation7 + $0x44] sm:$0xf]
        %v461 = vld [vmem:[#allocation7 + $0x48] sm:$0xf]
        %v462 = vld [vmem:[#allocation7 + $0x4c] sm:$0xf]
        %v463 = vld [vmem:[#allocation7 + $0x50] sm:$0xf]
        %v464 = vld [vmem:[#allocation7 + $0x54] sm:$0xf]
        %v465 = vld [vmem:[#allocation7 + $0x58] sm:$0xf]
        %v466 = vld [vmem:[#allocation7 + $0x5c] sm:$0xf]
        %v467 = vld [vmem:[#allocation7 + $0x60] sm:$0xf]
        %v468 = vld [vmem:[#allocation7 + $0x64] sm:$0xf]
        %v469 = vld [vmem:[#allocation7 + $0x68] sm:$0xf]
        %v470 = vld [vmem:[#allocation7 + $0x6c] sm:$0xf]
        %v471 = vld [vmem:[#allocation7 + $0x70] sm:$0xf]
        %v472 = vld [vmem:[#allocation7 + $0x74] sm:$0xf]
        %v473 = vld [vmem:[#allocation7 + $0x78] sm:$0xf]
        %v474 = vld [vmem:[#allocation7 + $0x7c] sm:$0xf]
        %v475 = vld [vmem:[%s2] sm:$0x1]
        %v477 = vlaneseq
        %v478 = vshrl.u32 %v477, 7
        %v479 = vsub.s32 0, %v478
        %v480 = vrot.slane %v475, %v479
        %v514 = vunpack.c.l.b16 %v443
        %v515 = vunpack.c.l.b16 %v444
        %v516 = vunpack.c.l.b16 %v445
        %v517 = vunpack.c.l.b16 %v446
        %v518 = vunpack.c.l.b16 %v447
        %v519 = vunpack.c.l.b16 %v448
        %v520 = vunpack.c.l.b16 %v449
        %v521 = vunpack.c.l.b16 %v450
        %v522 = vunpack.c.l.b16 %v451
        %v523 = vunpack.c.l.b16 %v452
        %v524 = vunpack.c.l.b16 %v453
        %v525 = vunpack.c.l.b16 %v454
        %v526 = vunpack.c.l.b16 %v455
        %v527 = vunpack.c.l.b16 %v456
        %v528 = vunpack.c.l.b16 %v457
        %v529 = vunpack.c.l.b16 %v458
        %v530 = vunpack.c.l.b16 %v459
        %v531 = vunpack.c.l.b16 %v460
        %v532 = vunpack.c.l.b16 %v461
        %v533 = vunpack.c.l.b16 %v462
        %v534 = vunpack.c.l.b16 %v463
        %v535 = vunpack.c.l.b16 %v464
        %v536 = vunpack.c.l.b16 %v465
        %v537 = vunpack.c.l.b16 %v466
        %v538 = vunpack.c.l.b16 %v467
        %v539 = vunpack.c.l.b16 %v468
        %v540 = vunpack.c.l.b16 %v469
        %v541 = vunpack.c.l.b16 %v470
        %v542 = vunpack.c.l.b16 %v471
        %v543 = vunpack.c.l.b16 %v472
        %v544 = vunpack.c.l.b16 %v473
        %v545 = vunpack.c.l.b16 %v474
        %v546 = vpack.c.b16 %v515, %v514
        %v547 = vpack.c.b16 %v517, %v516
        %v548 = vpack.c.b16 %v519, %v518
        %v549 = vpack.c.b16 %v521, %v520
        %v550 = vpack.c.b16 %v523, %v522
        %v551 = vpack.c.b16 %v525, %v524
        %v552 = vpack.c.b16 %v527, %v526
        %v553 = vpack.c.b16 %v529, %v528
        %v554 = vpack.c.b16 %v531, %v530
        %v555 = vpack.c.b16 %v533, %v532
        %v556 = vpack.c.b16 %v535, %v534
        %v557 = vpack.c.b16 %v537, %v536
        %v558 = vpack.c.b16 %v539, %v538
        %v559 = vpack.c.b16 %v541, %v540
        %v560 = vpack.c.b16 %v543, %v542
        %v561 = vpack.c.b16 %v545, %v544
        %578 = vmatprep.subr.bf16.mxu0 0
        %579 = vmatpush1.bf16.msra.mxu0 %v546
        %580 = vmatprep.subr.bf16.mxu0 0
        %581 = vmatpush1.bf16.msra.mxu0 %v547
        %582 = vmatprep.subr.bf16.mxu0 0
        %583 = vmatpush1.bf16.msra.mxu0 %v548
        %584 = vmatprep.subr.bf16.mxu0 0
        %585 = vmatpush1.bf16.msra.mxu0 %v549
        %586 = vmatprep.subr.bf16.mxu0 0
        %587 = vmatpush1.bf16.msra.mxu0 %v550
        %588 = vmatprep.subr.bf16.mxu0 0
        %589 = vmatpush1.bf16.msra.mxu0 %v551
        %590 = vmatprep.subr.bf16.mxu0 0
        %591 = vmatpush1.bf16.msra.mxu0 %v552
        %592 = vmatprep.subr.bf16.mxu0 0
        %593 = vmatpush1.bf16.msra.mxu0 %v553
        %594 = vmatprep.subr.bf16.mxu0 0
        %595 = vmatpush1.bf16.msra.mxu0 %v554
        %596 = vmatprep.subr.bf16.mxu0 0
        %597 = vmatpush1.bf16.msra.mxu0 %v555
        %598 = vmatprep.subr.bf16.mxu0 0
        %599 = vmatpush1.bf16.msra.mxu0 %v556
        %600 = vmatprep.subr.bf16.mxu0 0
        %601 = vmatpush1.bf16.msra.mxu0 %v557
        %602 = vmatprep.subr.bf16.mxu0 0
        %603 = vmatpush1.bf16.msra.mxu0 %v558
        %604 = vmatprep.subr.bf16.mxu0 0
        %605 = vmatpush1.bf16.msra.mxu0 %v559
        %606 = vmatprep.subr.bf16.mxu0 0
        %607 = vmatpush1.bf16.msra.mxu0 %v560
        %608 = vmatprep.subr.bf16.mxu0 0
        %609 = vmatpush1.bf16.msra.mxu0 %v561
        %610 = vmatprep.mubr.bf16.mxu0 %v436
        %611 = vmatmul.mubr.bf16.gmra.mrb[0].mxu0 %v435
        %v612 = vpop.f32.mrb[0].mxu0
        %v613 = vadd.f32 %v480, %v612
        %v614 = vpop.f32.mrb[0].mxu0
        %v615 = vpop.f32.mrb[0].mxu0
        %v616 = vadd.f32 %v480, %v615
        %v617 = vpop.f32.mrb[0].mxu0
        %618 = vmatprep.mubr.bf16.mxu0 %v438
        %619 = vmatmul.mubr.bf16.gmra.mrb[0].mxu0 %v437
        %v620 = vpop.f32.mrb[0].mxu0
        %v621 = vadd.f32 %v480, %v620
        %v622 = vpop.f32.mrb[0].mxu0
        %v623 = vpop.f32.mrb[0].mxu0
        %v624 = vadd.f32 %v480, %v623
        %v625 = vpop.f32.mrb[0].mxu0
        %626 = vmatprep.mubr.bf16.mxu0 %v440
        %627 = vmatmul.mubr.bf16.gmra.mrb[0].mxu0 %v439
        %v628 = vpop.f32.mrb[0].mxu0
        %v629 = vadd.f32 %v480, %v628
        %v630 = vpop.f32.mrb[0].mxu0
        %v631 = vpop.f32.mrb[0].mxu0
        %v632 = vadd.f32 %v480, %v631
        %v633 = vpop.f32.mrb[0].mxu0
        %634 = vmatprep.mubr.bf16.mxu0 %v442
        %635 = vmatmul.mubr.bf16.gmra.mrb[0].mxu0 %v441
        %v636 = vpop.f32.mrb[0].mxu0
        %v637 = vadd.f32 %v480, %v636
        %v638 = vpop.f32.mrb[0].mxu0
        %v639 = vpop.f32.mrb[0].mxu0
        %v640 = vadd.f32 %v480, %v639
        %v641 = vpop.f32.mrb[0].mxu0
        %642 = vdwg.mxu0
        %v643 = vmax.f32 %v613, 0.0
        %v644 = vmax.f32 %v616, 0.0
        %v645 = vmax.f32 %v621, 0.0
        %v646 = vmax.f32 %v624, 0.0
        %v647 = vmax.f32 %v629, 0.0
        %v648 = vmax.f32 %v632, 0.0
        %v649 = vmax.f32 %v637, 0.0
        %v650 = vmax.f32 %v640, 0.0
        %651 = vst [vmem:[%s399] sm:$0xff] %v643
        %652 = vst [vmem:[%s399 + $0x8] sm:$0xff] %v644
        %653 = vst [vmem:[%s399 + $0x10] sm:$0xff] %v645
        %654 = vst [vmem:[%s399 + $0x18] sm:$0xff] %v646
        %655 = vst [vmem:[%s399 + $0x20] sm:$0xff] %v647
        %656 = vst [vmem:[%s399 + $0x28] sm:$0xff] %v648
        %657 = vst [vmem:[%s399 + $0x30] sm:$0xff] %v649
        %658 = vst [vmem:[%s399 + $0x38] sm:$0xff] %v650
        %659 = vst [vmem:[#allocation2] sm:$0xff] 0.0
        %660 = vst [vmem:[#allocation2 + $0x8] sm:$0xff] 0.0
        %661 = vst [vmem:[#allocation2 + $0x10] sm:$0xff] 0.0
        %662 = vst [vmem:[#allocation2 + $0x18] sm:$0xff] 0.0
        %663 = vst [vmem:[#allocation2 + $0x20] sm:$0xff] 0.0
        %664 = vst [vmem:[#allocation2 + $0x28] sm:$0xff] 0.0
        %v665 = vmax.f32 %v643, %v644
        %v666 = vmax.f32 %v644, %v645
        %v667 = vmax.f32 %v666, %v646
        %v668 = vmax.f32 %v646, %v647
        %v669 = vmax.f32 %v668, %v648
        %v670 = vmax.f32 %v648, %v649
        %v671 = vmax.f32 %v670, %v650
        %v676 = vrot.slane %v665, 1
        %v677 = vrot.slane %v667, 1
        %v678 = vrot.slane %v669, 1
        %v679 = vrot.slane %v671, 1
        %v684 = vmax.f32 %v665, %v676
        %v685 = vmax.f32 %v667, %v677
        %v686 = vmax.f32 %v669, %v678
        %v687 = vmax.f32 %v671, %v679
        %s688 = scalar_lea.vmem [#allocation2], 8
        %689 = vst [vmem:[%s688 + $0x1] sm:$0x1] %v684
        %690 = vst [vmem:[%s688 + $0x9] sm:$0x1] %v685
        %691 = vst [vmem:[%s688 + $0x11] sm:$0x1] %v686
        %692 = vst [vmem:[%s688 + $0x19] sm:$0x1] %v687
        %v693 = vrot.slane %v665, 2
        %v694 = vrot.slane %v667, 2
        %v695 = vrot.slane %v669, 2
        %v696 = vrot.slane %v671, 2
        %v701 = vmax.f32 %v684, %v693
        %v702 = vmax.f32 %v685, %v694
        %v703 = vmax.f32 %v686, %v695
        %v704 = vmax.f32 %v687, %v696
        %705 = vst [vmem:[%s688 + $0x1] sm:$0x2] %v701
        %706 = vst [vmem:[%s688 + $0x9] sm:$0x2] %v702
        %707 = vst [vmem:[%s688 + $0x11] sm:$0x2] %v703
        %708 = vst [vmem:[%s688 + $0x19] sm:$0x2] %v704
        %709 = vst [vmem:[%s688] sm:$0x8] %v701
        %710 = vst [vmem:[%s688 + $0x8] sm:$0x8] %v702
        %711 = vst [vmem:[%s688 + $0x10] sm:$0x8] %v703
        %712 = vst [vmem:[%s688 + $0x18] sm:$0x8] %v704
        %713 = vst [vmem:[%s688 - $0x1] sm:$0x20] %v701
        %714 = vst [vmem:[%s688 + $0x7] sm:$0x20] %v702
        %715 = vst [vmem:[%s688 + $0xf] sm:$0x20] %v703
        %716 = vst [vmem:[%s688 + $0x17] sm:$0x20] %v704
        %v717 = vld [vmem:[%s688 + $0x1] sm:$0xf]
        %v718 = vld [vmem:[%s688 + $0x9] sm:$0xf]
        %v719 = vld [vmem:[%s688 + $0x11] sm:$0xf]
        %v720 = vld [vmem:[%s688 + $0x19] sm:$0xf]
        %721 = vst [vmem:[%s406] sm:$0xf] %v717
        %722 = vst [vmem:[%s406 + $0x4] sm:$0xf] %v718
        %723 = vst [vmem:[%s406 + $0x8] sm:$0xf] %v719
        %724 = vst [vmem:[%s406 + $0xc] sm:$0xf] %v720
        %v725 = vld [vmem:[#allocation2] sm:$0xff]
        %v726 = vld [vmem:[#allocation2 + $0x8] sm:$0xff]
        %v727 = vld [vmem:[#allocation2 + $0x10] sm:$0xff]
        %v728 = vld [vmem:[#allocation2 + $0x18] sm:$0xff]
        %v729 = vld [vmem:[#allocation2 + $0x20] sm:$0xff]
        %v730 = vld [vmem:[#allocation2 + $0x28] sm:$0xff]
        %v731 = vpack.c.bf16 %v726, %v725
        %v732 = vpack.c.bf16 %v728, %v727
        %v733 = vpack.c.bf16 %v730, %v729
        %v734 = vld [vmem:[#allocation9] sm:$0xff]
        %v735 = vld [vmem:[#allocation9 + $0x8] sm:$0xff]
        %v736 = vld [vmem:[#allocation9 + $0x10] sm:$0xff]
        %v737 = vld [vmem:[#allocation9 + $0x18] sm:$0xff]
        %v738 = vld [vmem:[#allocation9 + $0x20] sm:$0xf]
        %v739 = vld [vmem:[#allocation9 + $0x24] sm:$0xff]
        %v740 = vld [vmem:[#allocation9 + $0x2c] sm:$0xff]
        %v741 = vld [vmem:[#allocation9 + $0x34] sm:$0xff]
        %v742 = vld [vmem:[#allocation9 + $0x3c] sm:$0xff]
        %v743 = vld [vmem:[#allocation9 + $0x44] sm:$0xf]
        %v744 = vld [vmem:[#allocation9 + $0x48] sm:$0xff]
        %v745 = vld [vmem:[#allocation9 + $0x50] sm:$0xff]
        %v746 = vld [vmem:[#allocation9 + $0x58] sm:$0xff]
        %v747 = vld [vmem:[#allocation9 + $0x60] sm:$0xff]
        %v748 = vld [vmem:[#allocation9 + $0x68] sm:$0xf]
        %v749 = vld [vmem:[#allocation9 + $0x6c] sm:$0xff]
        %v750 = vld [vmem:[#allocation9 + $0x74] sm:$0xff]
        %v751 = vld [vmem:[#allocation9 + $0x7c] sm:$0xff]
        %v752 = vld [vmem:[#allocation9 + $0x84] sm:$0xff]
        %v753 = vld [vmem:[#allocation9 + $0x8c] sm:$0xf]
        %v754 = vld [vmem:[#allocation9 + $0x90] sm:$0xff]
        %v755 = vld [vmem:[#allocation9 + $0x98] sm:$0xff]
        %v756 = vld [vmem:[#allocation9 + $0xa0] sm:$0xff]
        %v757 = vld [vmem:[#allocation9 + $0xa8] sm:$0xff]
        %v758 = vld [vmem:[#allocation9 + $0xb0] sm:$0xf]
        %v759 = vld [vmem:[#allocation9 + $0xb4] sm:$0xff]
        %v760 = vld [vmem:[#allocation9 + $0xbc] sm:$0xff]
        %v761 = vld [vmem:[#allocation9 + $0xc4] sm:$0xff]
        %v762 = vld [vmem:[#allocation9 + $0xcc] sm:$0xff]
        %v763 = vld [vmem:[#allocation9 + $0xd4] sm:$0xf]
        %v764 = vld [vmem:[#allocation9 + $0xd8] sm:$0xff]
        %v765 = vld [vmem:[#allocation9 + $0xe0] sm:$0xff]
        %v766 = vld [vmem:[#allocation9 + $0xe8] sm:$0xff]
        %v767 = vld [vmem:[#allocation9 + $0xf0] sm:$0xff]
        %v768 = vld [vmem:[#allocation9 + $0xf8] sm:$0xf]
        %v769 = vld [vmem:[#allocation9 + $0xfc] sm:$0xff]
        %v770 = vld [vmem:[#allocation9 + $0x104] sm:$0xff]
        %v771 = vld [vmem:[#allocation9 + $0x10c] sm:$0xff]
        %v772 = vld [vmem:[#allocation9 + $0x114] sm:$0xff]
        %v773 = vld [vmem:[#allocation9 + $0x11c] sm:$0xf]
        %v774 = vld [vmem:[#allocation9 + $0x120] sm:$0xff]
        %v775 = vld [vmem:[#allocation9 + $0x128] sm:$0xff]
        %v776 = vld [vmem:[#allocation9 + $0x130] sm:$0xff]
        %v777 = vld [vmem:[#allocation9 + $0x138] sm:$0xff]
        %v778 = vld [vmem:[#allocation9 + $0x140] sm:$0xf]
        %v779 = vld [vmem:[#allocation9 + $0x144] sm:$0xff]
        %v780 = vld [vmem:[#allocation9 + $0x14c] sm:$0xff]
        %v781 = vld [vmem:[#allocation9 + $0x154] sm:$0xff]
        %v782 = vld [vmem:[#allocation9 + $0x15c] sm:$0xff]
        %v783 = vld [vmem:[#allocation9 + $0x164] sm:$0xf]
        %v784 = vld [vmem:[#allocation9 + $0x168] sm:$0xff]
        %v785 = vld [vmem:[#allocation9 + $0x170] sm:$0xff]
        %v786 = vld [vmem:[#allocation9 + $0x178] sm:$0xff]
        %v787 = vld [vmem:[#allocation9 + $0x180] sm:$0xff]
        %v788 = vld [vmem:[#allocation9 + $0x188] sm:$0xf]
        %v789 = vld [vmem:[#allocation9 + $0x18c] sm:$0xff]
        %v790 = vld [vmem:[#allocation9 + $0x194] sm:$0xff]
        %v791 = vld [vmem:[#allocation9 + $0x19c] sm:$0xff]
        %v792 = vld [vmem:[#allocation9 + $0x1a4] sm:$0xff]
        %v793 = vld [vmem:[#allocation9 + $0x1ac] sm:$0xf]
        %v794 = vld [vmem:[#allocation9 + $0x1b0] sm:$0xff]
        %v795 = vld [vmem:[#allocation9 + $0x1b8] sm:$0xff]
        %v796 = vld [vmem:[#allocation9 + $0x1c0] sm:$0xff]
        %v797 = vld [vmem:[#allocation9 + $0x1c8] sm:$0xff]
        %v798 = vld [vmem:[#allocation9 + $0x1d0] sm:$0xf]
        %v799 = vld [vmem:[#allocation9 + $0x1d4] sm:$0xff]
        %v800 = vld [vmem:[#allocation9 + $0x1dc] sm:$0xff]
        %v801 = vld [vmem:[#allocation9 + $0x1e4] sm:$0xff]
        %v802 = vld [vmem:[#allocation9 + $0x1ec] sm:$0xff]
        %v803 = vld [vmem:[#allocation9 + $0x1f4] sm:$0xf]
        %v804 = vld [vmem:[#allocation9 + $0x1f8] sm:$0xff]
        %v805 = vld [vmem:[#allocation9 + $0x200] sm:$0xff]
        %v806 = vld [vmem:[#allocation9 + $0x208] sm:$0xff]
        %v807 = vld [vmem:[#allocation9 + $0x210] sm:$0xff]
        %v808 = vld [vmem:[#allocation9 + $0x218] sm:$0xf]
        %v809 = vld [vmem:[#allocation9 + $0x21c] sm:$0xff]
        %v810 = vld [vmem:[#allocation9 + $0x224] sm:$0xff]
        %v811 = vld [vmem:[#allocation9 + $0x22c] sm:$0xff]
        %v812 = vld [vmem:[#allocation9 + $0x234] sm:$0xff]
        %v813 = vld [vmem:[#allocation9 + $0x23c] sm:$0xf]
        %v894 = vunpack.c.l.b16 %v734
        %v895 = vunpack.c.h.b16 %v734
        %v896 = vunpack.c.l.b16 %v735
        %v897 = vunpack.c.h.b16 %v735
        %v898 = vunpack.c.l.b16 %v736
        %v899 = vunpack.c.h.b16 %v736
        %v900 = vunpack.c.l.b16 %v737
        %v901 = vunpack.c.h.b16 %v737
        %v902 = vunpack.c.l.b16 %v738
        %v903 = vunpack.c.l.b16 %v739
        %v904 = vunpack.c.h.b16 %v739
        %v905 = vunpack.c.l.b16 %v740
        %v906 = vunpack.c.h.b16 %v740
        %v907 = vunpack.c.l.b16 %v741
        %v908 = vunpack.c.h.b16 %v741
        %v909 = vunpack.c.l.b16 %v742
        %v910 = vunpack.c.h.b16 %v742
        %v911 = vunpack.c.l.b16 %v743
        %v912 = vunpack.c.l.b16 %v744
        %v913 = vunpack.c.h.b16 %v744
        %v914 = vunpack.c.l.b16 %v745
        %v915 = vunpack.c.h.b16 %v745
        %v916 = vunpack.c.l.b16 %v746
        %v917 = vunpack.c.h.b16 %v746
        %v918 = vunpack.c.l.b16 %v747
        %v919 = vunpack.c.h.b16 %v747
        %v920 = vunpack.c.l.b16 %v748
        %v921 = vunpack.c.l.b16 %v749
        %v922 = vunpack.c.h.b16 %v749
        %v923 = vunpack.c.l.b16 %v750
        %v924 = vunpack.c.h.b16 %v750
        %v925 = vunpack.c.l.b16 %v751
        %v926 = vunpack.c.h.b16 %v751
        %v927 = vunpack.c.l.b16 %v752
        %v928 = vunpack.c.h.b16 %v752
        %v929 = vunpack.c.l.b16 %v753
        %v930 = vunpack.c.l.b16 %v754
        %v931 = vunpack.c.h.b16 %v754
        %v932 = vunpack.c.l.b16 %v755
        %v933 = vunpack.c.h.b16 %v755
        %v934 = vunpack.c.l.b16 %v756
        %v935 = vunpack.c.h.b16 %v756
        %v936 = vunpack.c.l.b16 %v757
        %v937 = vunpack.c.h.b16 %v757
        %v938 = vunpack.c.l.b16 %v758
        %v939 = vunpack.c.l.b16 %v759
        %v940 = vunpack.c.h.b16 %v759
        %v941 = vunpack.c.l.b16 %v760
        %v942 = vunpack.c.h.b16 %v760
        %v943 = vunpack.c.l.b16 %v761
        %v944 = vunpack.c.h.b16 %v761
        %v945 = vunpack.c.l.b16 %v762
        %v946 = vunpack.c.h.b16 %v762
        %v947 = vunpack.c.l.b16 %v763
        %v948 = vunpack.c.l.b16 %v764
        %v949 = vunpack.c.h.b16 %v764
        %v950 = vunpack.c.l.b16 %v765
        %v951 = vunpack.c.h.b16 %v765
        %v952 = vunpack.c.l.b16 %v766
        %v953 = vunpack.c.h.b16 %v766
        %v954 = vunpack.c.l.b16 %v767
        %v955 = vunpack.c.h.b16 %v767
        %v956 = vunpack.c.l.b16 %v768
        %v957 = vunpack.c.l.b16 %v769
        %v958 = vunpack.c.h.b16 %v769
        %v959 = vunpack.c.l.b16 %v770
        %v960 = vunpack.c.h.b16 %v770
        %v961 = vunpack.c.l.b16 %v771
        %v962 = vunpack.c.h.b16 %v771
        %v963 = vunpack.c.l.b16 %v772
        %v964 = vunpack.c.h.b16 %v772
        %v965 = vunpack.c.l.b16 %v773
        %v966 = vunpack.c.l.b16 %v774
        %v967 = vunpack.c.h.b16 %v774
        %v968 = vunpack.c.l.b16 %v775
        %v969 = vunpack.c.h.b16 %v775
        %v970 = vunpack.c.l.b16 %v776
        %v971 = vunpack.c.h.b16 %v776
        %v972 = vunpack.c.l.b16 %v777
        %v973 = vunpack.c.h.b16 %v777
        %v974 = vunpack.c.l.b16 %v778
        %v975 = vunpack.c.l.b16 %v779
        %v976 = vunpack.c.h.b16 %v779
        %v977 = vunpack.c.l.b16 %v780
        %v978 = vunpack.c.h.b16 %v780
        %v979 = vunpack.c.l.b16 %v781
        %v980 = vunpack.c.h.b16 %v781
        %v981 = vunpack.c.l.b16 %v782
        %v982 = vunpack.c.h.b16 %v782
        %v983 = vunpack.c.l.b16 %v783
        %v984 = vunpack.c.l.b16 %v784
        %v985 = vunpack.c.h.b16 %v784
        %v986 = vunpack.c.l.b16 %v785
        %v987 = vunpack.c.h.b16 %v785
        %v988 = vunpack.c.l.b16 %v786
        %v989 = vunpack.c.h.b16 %v786
        %v990 = vunpack.c.l.b16 %v787
        %v991 = vunpack.c.h.b16 %v787
        %v992 = vunpack.c.l.b16 %v788
        %v993 = vunpack.c.l.b16 %v789
        %v994 = vunpack.c.h.b16 %v789
        %v995 = vunpack.c.l.b16 %v790
        %v996 = vunpack.c.h.b16 %v790
        %v997 = vunpack.c.l.b16 %v791
        %v998 = vunpack.c.h.b16 %v791
        %v999 = vunpack.c.l.b16 %v792
        %v1000 = vunpack.c.h.b16 %v792
        %v1001 = vunpack.c.l.b16 %v793
        %v1002 = vunpack.c.l.b16 %v794
        %v1003 = vunpack.c.h.b16 %v794
        %v1004 = vunpack.c.l.b16 %v795
        %v1005 = vunpack.c.h.b16 %v795
        %v1006 = vunpack.c.l.b16 %v796
        %v1007 = vunpack.c.h.b16 %v796
        %v1008 = vunpack.c.l.b16 %v797
        %v1009 = vunpack.c.h.b16 %v797
        %v1010 = vunpack.c.l.b16 %v798
        %v1011 = vunpack.c.l.b16 %v799
        %v1012 = vunpack.c.h.b16 %v799
        %v1013 = vunpack.c.l.b16 %v800
        %v1014 = vunpack.c.h.b16 %v800
        %v1015 = vunpack.c.l.b16 %v801
        %v1016 = vunpack.c.h.b16 %v801
        %v1017 = vunpack.c.l.b16 %v802
        %v1018 = vunpack.c.h.b16 %v802
        %v1019 = vunpack.c.l.b16 %v803
        %v1020 = vunpack.c.l.b16 %v804
        %v1021 = vunpack.c.h.b16 %v804
        %v1022 = vunpack.c.l.b16 %v805
        %v1023 = vunpack.c.h.b16 %v805
        %v1024 = vunpack.c.l.b16 %v806
        %v1025 = vunpack.c.h.b16 %v806
        %v1026 = vunpack.c.l.b16 %v807
        %v1027 = vunpack.c.h.b16 %v807
        %v1028 = vunpack.c.l.b16 %v808
        %v1029 = vunpack.c.l.b16 %v809
        %v1030 = vunpack.c.h.b16 %v809
        %v1031 = vunpack.c.l.b16 %v810
        %v1032 = vunpack.c.h.b16 %v810
        %v1033 = vunpack.c.l.b16 %v811
        %v1034 = vunpack.c.h.b16 %v811
        %v1035 = vunpack.c.l.b16 %v812
        %v1036 = vunpack.c.h.b16 %v812
        %v1037 = vunpack.c.l.b16 %v813
        %v1038 = vpack.c.b16 %v903, %v894
        %v1039 = vpack.c.b16 %v904, %v895
        %v1040 = vpack.c.b16 %v905, %v896
        %v1041 = vpack.c.b16 %v906, %v897
        %v1042 = vpack.c.b16 %v907, %v898
        %v1043 = vpack.c.b16 %v908, %v899
        %v1044 = vpack.c.b16 %v909, %v900
        %v1045 = vpack.c.b16 %v910, %v901
        %v1046 = vpack.c.b16 %v911, %v902
        %v1047 = vpack.c.b16 %v921, %v912
        %v1048 = vpack.c.b16 %v922, %v913
        %v1049 = vpack.c.b16 %v923, %v914
        %v1050 = vpack.c.b16 %v924, %v915
        %v1051 = vpack.c.b16 %v925, %v916
        %v1052 = vpack.c.b16 %v926, %v917
        %v1053 = vpack.c.b16 %v927, %v918
        %v1054 = vpack.c.b16 %v928, %v919
        %v1055 = vpack.c.b16 %v929, %v920
        %v1056 = vpack.c.b16 %v939, %v930
        %v1057 = vpack.c.b16 %v940, %v931
        %v1058 = vpack.c.b16 %v941, %v932
        %v1059 = vpack.c.b16 %v942, %v933
        %v1060 = vpack.c.b16 %v943, %v934
        %v1061 = vpack.c.b16 %v944, %v935
        %v1062 = vpack.c.b16 %v945, %v936
        %v1063 = vpack.c.b16 %v946, %v937
        %v1064 = vpack.c.b16 %v947, %v938
        %v1065 = vpack.c.b16 %v957, %v948
        %v1066 = vpack.c.b16 %v958, %v949
        %v1067 = vpack.c.b16 %v959, %v950
        %v1068 = vpack.c.b16 %v960, %v951
        %v1069 = vpack.c.b16 %v961, %v952
        %v1070 = vpack.c.b16 %v962, %v953
        %v1071 = vpack.c.b16 %v963, %v954
        %v1072 = vpack.c.b16 %v964, %v955
        %v1073 = vpack.c.b16 %v965, %v956
        %v1074 = vpack.c.b16 %v975, %v966
        %v1075 = vpack.c.b16 %v976, %v967
        %v1076 = vpack.c.b16 %v977, %v968
        %v1077 = vpack.c.b16 %v978, %v969
        %v1078 = vpack.c.b16 %v979, %v970
        %v1079 = vpack.c.b16 %v980, %v971
        %v1080 = vpack.c.b16 %v981, %v972
        %v1081 = vpack.c.b16 %v982, %v973
        %v1082 = vpack.c.b16 %v983, %v974
        %v1083 = vpack.c.b16 %v993, %v984
        %v1084 = vpack.c.b16 %v994, %v985
        %v1085 = vpack.c.b16 %v995, %v986
        %v1086 = vpack.c.b16 %v996, %v987
        %v1087 = vpack.c.b16 %v997, %v988
        %v1088 = vpack.c.b16 %v998, %v989
        %v1089 = vpack.c.b16 %v999, %v990
        %v1090 = vpack.c.b16 %v1000, %v991
        %v1091 = vpack.c.b16 %v1001, %v992
        %v1092 = vpack.c.b16 %v1011, %v1002
        %v1093 = vpack.c.b16 %v1012, %v1003
        %v1094 = vpack.c.b16 %v1013, %v1004
        %v1095 = vpack.c.b16 %v1014, %v1005
        %v1096 = vpack.c.b16 %v1015, %v1006
        %v1097 = vpack.c.b16 %v1016, %v1007
        %v1098 = vpack.c.b16 %v1017, %v1008
        %v1099 = vpack.c.b16 %v1018, %v1009
        %v1100 = vpack.c.b16 %v1019, %v1010
        %v1101 = vpack.c.b16 %v1029, %v1020
        %v1102 = vpack.c.b16 %v1030, %v1021
        %v1103 = vpack.c.b16 %v1031, %v1022
        %v1104 = vpack.c.b16 %v1032, %v1023
        %v1105 = vpack.c.b16 %v1033, %v1024
        %v1106 = vpack.c.b16 %v1034, %v1025
        %v1107 = vpack.c.b16 %v1035, %v1026
        %v1108 = vpack.c.b16 %v1036, %v1027
        %v1109 = vpack.c.b16 %v1037, %v1028
        %1182 = vmatprep.subr.bf16.mxu0 %v1039
        %1183 = vmatpush1.bf16.msra.mxu0 %v1038
        %1184 = vmatprep.subr.bf16.mxu0 %v1048
        %1185 = vmatpush1.bf16.msra.mxu0 %v1047
        %1186 = vmatprep.subr.bf16.mxu0 %v1057
        %1187 = vmatpush1.bf16.msra.mxu0 %v1056
        %1188 = vmatprep.subr.bf16.mxu0 %v1066
        %1189 = vmatpush1.bf16.msra.mxu0 %v1065
        %1190 = vmatprep.subr.bf16.mxu0 %v1075
        %1191 = vmatpush1.bf16.msra.mxu0 %v1074
        %1192 = vmatprep.subr.bf16.mxu0 %v1084
        %1193 = vmatpush1.bf16.msra.mxu0 %v1083
        %1194 = vmatprep.subr.bf16.mxu0 %v1093
        %1195 = vmatpush1.bf16.msra.mxu0 %v1092
        %1196 = vmatprep.subr.bf16.mxu0 %v1102
        %1197 = vmatpush1.bf16.msra.mxu0 %v1101
        %1198 = vmatprep.subr.bf16.mxu0 0
        %1199 = vmatpush1.bf16.msra.mxu0 0
        %1200 = vmatprep.subr.bf16.mxu0 0
        %1201 = vmatpush1.bf16.msra.mxu0 0
        %1202 = vmatprep.subr.bf16.mxu0 0
        %1203 = vmatpush1.bf16.msra.mxu0 0
        %1204 = vmatprep.subr.bf16.mxu0 0
        %1205 = vmatpush1.bf16.msra.mxu0 0
        %1206 = vmatprep.subr.bf16.mxu0 0
        %1207 = vmatpush1.bf16.msra.mxu0 0
        %1208 = vmatprep.subr.bf16.mxu0 0
        %1209 = vmatpush1.bf16.msra.mxu0 0
        %1210 = vmatprep.subr.bf16.mxu0 0
        %1211 = vmatpush1.bf16.msra.mxu0 0
        %1212 = vmatprep.subr.bf16.mxu0 0
        %1213 = vmatpush1.bf16.msra.mxu0 0
        %1214 = vmatprep.mubr.bf16.mxu0 0
        %1215 = vmatmul.mubr.bf16.gmra.mrb[0].mxu0 %v731
        %v1216 = vpop.f32.mrb[0].mxu0
        %v1217 = vadd.f32 0.0, %v1216
        %v1218 = vpop.f32.mrb[0].mxu0
        %v1219 = vadd.f32 0.0, %v1218
        %v1220 = vpop.f32.mrb[0].mxu0
        %v1221 = vadd.f32 0.0, %v1220
        %v1222 = vpop.f32.mrb[0].mxu0
        %v1223 = vadd.f32 0.0, %v1222
        %1224 = vmatprep.mubr.bf16.mxu0 0
        %1225 = vmatmul.mubr.bf16.gmra.mrb[0].mxu0 %v732
        %v1226 = vpop.f32.mrb[0].mxu0
        %v1227 = vadd.f32 0.0, %v1226
        %v1228 = vpop.f32.mrb[0].mxu0
        %v1229 = vadd.f32 0.0, %v1228
        %v1230 = vpop.f32.mrb[0].mxu0
        %v1231 = vadd.f32 0.0, %v1230
        %v1232 = vpop.f32.mrb[0].mxu0
        %v1233 = vadd.f32 0.0, %v1232
        %1234 = vmatprep.mubr.bf16.mxu0 0
        %1235 = vmatmul.mubr.bf16.gmra.mrb[0].mxu0 %v733
        %v1236 = vpop.f32.mrb[0].mxu0
        %v1237 = vpop.f32.mrb[0].mxu0
        %v1238 = vpop.f32.mrb[0].mxu0
        %v1239 = vpop.f32.mrb[0].mxu0
        %1240 = vdwg.mxu0
        %1241 = vmatprep.subr.bf16.mxu0 %v1041
        %1242 = vmatpush1.bf16.msra.mxu0 %v1040
        %1243 = vmatprep.subr.bf16.mxu0 %v1050
        %1244 = vmatpush1.bf16.msra.mxu0 %v1049
        %1245 = vmatprep.subr.bf16.mxu0 %v1059
        %1246 = vmatpush1.bf16.msra.mxu0 %v1058
        %1247 = vmatprep.subr.bf16.mxu0 %v1068
        %1248 = vmatpush1.bf16.msra.mxu0 %v1067
        %1249 = vmatprep.subr.bf16.mxu0 %v1077
        %1250 = vmatpush1.bf16.msra.mxu0 %v1076
        %1251 = vmatprep.subr.bf16.mxu0 %v1086
        %1252 = vmatpush1.bf16.msra.mxu0 %v1085
        %1253 = vmatprep.subr.bf16.mxu0 %v1095
        %1254 = vmatpush1.bf16.msra.mxu0 %v1094
        %1255 = vmatprep.subr.bf16.mxu0 %v1104
        %1256 = vmatpush1.bf16.msra.mxu0 %v1103
        %1257 = vmatprep.subr.bf16.mxu0 0
        %1258 = vmatpush1.bf16.msra.mxu0 0
        %1259 = vmatprep.subr.bf16.mxu0 0
        %1260 = vmatpush1.bf16.msra.mxu0 0
        %1261 = vmatprep.subr.bf16.mxu0 0
        %1262 = vmatpush1.bf16.msra.mxu0 0
        %1263 = vmatprep.subr.bf16.mxu0 0
        %1264 = vmatpush1.bf16.msra.mxu0 0
        %1265 = vmatprep.subr.bf16.mxu0 0
        %1266 = vmatpush1.bf16.msra.mxu0 0
        %1267 = vmatprep.subr.bf16.mxu0 0
        %1268 = vmatpush1.bf16.msra.mxu0 0
        %1269 = vmatprep.subr.bf16.mxu0 0
        %1270 = vmatpush1.bf16.msra.mxu0 0
        %1271 = vmatprep.subr.bf16.mxu0 0
        %1272 = vmatpush1.bf16.msra.mxu0 0
        %1273 = vmatprep.mubr.bf16.mxu0 0
        %1274 = vmatmul.mubr.bf16.gmra.mrb[0].mxu0 %v731
        %v1275 = vpop.f32.mrb[0].mxu0
        %v1276 = vadd.f32 0.0, %v1275
        %v1277 = vpop.f32.mrb[0].mxu0
        %v1278 = vpop.f32.mrb[0].mxu0
        %v1279 = vadd.f32 0.0, %v1278
        %v1280 = vpop.f32.mrb[0].mxu0
        %v1281 = vadd.f32 0.0, %v1280
        %1282 = vmatprep.mubr.bf16.mxu0 0
        %1283 = vmatmul.mubr.bf16.gmra.mrb[0].mxu0 %v732
        %v1284 = vpop.f32.mrb[0].mxu0
        %v1285 = vadd.f32 0.0, %v1284
        %v1286 = vpop.f32.mrb[0].mxu0
        %v1287 = vadd.f32 0.0, %v1286
        %v1288 = vpop.f32.mrb[0].mxu0
        %v1289 = vadd.f32 0.0, %v1288
        %v1290 = vpop.f32.mrb[0].mxu0
        %v1291 = vadd.f32 0.0, %v1290
        %1292 = vmatprep.mubr.bf16.mxu0 0
        %1293 = vmatmul.mubr.bf16.gmra.mrb[0].mxu0 %v733
        %v1294 = vpop.f32.mrb[0].mxu0
        %v1295 = vpop.f32.mrb[0].mxu0
        %v1296 = vadd.f32 0.0, %v1295
        %v1297 = vpop.f32.mrb[0].mxu0
        %v1298 = vpop.f32.mrb[0].mxu0
        %1299 = vdwg.mxu0
        %1300 = vmatprep.subr.bf16.mxu0 %v1043
        %1301 = vmatpush1.bf16.msra.mxu0 %v1042
        %1302 = vmatprep.subr.bf16.mxu0 %v1052
        %1303 = vmatpush1.bf16.msra.mxu0 %v1051
        %1304 = vmatprep.subr.bf16.mxu0 %v1061
        %1305 = vmatpush1.bf16.msra.mxu0 %v1060
        %1306 = vmatprep.subr.bf16.mxu0 %v1070
        %1307 = vmatpush1.bf16.msra.mxu0 %v1069
        %1308 = vmatprep.subr.bf16.mxu0 %v1079
        %1309 = vmatpush1.bf16.msra.mxu0 %v1078
        %1310 = vmatprep.subr.bf16.mxu0 %v1088
        %1311 = vmatpush1.bf16.msra.mxu0 %v1087
        %1312 = vmatprep.subr.bf16.mxu0 %v1097
        %1313 = vmatpush1.bf16.msra.mxu0 %v1096
        %1314 = vmatprep.subr.bf16.mxu0 %v1106
        %1315 = vmatpush1.bf16.msra.mxu0 %v1105
        %1316 = vmatprep.subr.bf16.mxu0 0
        %1317 = vmatpush1.bf16.msra.mxu0 0
        %1318 = vmatprep.subr.bf16.mxu0 0
        %1319 = vmatpush1.bf16.msra.mxu0 0
        %1320 = vmatprep.subr.bf16.mxu0 0
        %1321 = vmatpush1.bf16.msra.mxu0 0
        %1322 = vmatprep.subr.bf16.mxu0 0
        %1323 = vmatpush1.bf16.msra.mxu0 0
        %1324 = vmatprep.subr.bf16.mxu0 0
        %1325 = vmatpush1.bf16.msra.mxu0 0
        %1326 = vmatprep.subr.bf16.mxu0 0
        %1327 = vmatpush1.bf16.msra.mxu0 0
        %1328 = vmatprep.subr.bf16.mxu0 0
        %1329 = vmatpush1.bf16.msra.mxu0 0
        %1330 = vmatprep.subr.bf16.mxu0 0
        %1331 = vmatpush1.bf16.msra.mxu0 0
        %1332 = vmatprep.mubr.bf16.mxu0 0
        %1333 = vmatmul.mubr.bf16.gmra.mrb[0].mxu0 %v731
        %v1334 = vpop.f32.mrb[0].mxu0
        %v1335 = vpop.f32.mrb[0].mxu0
        %v1336 = vpop.f32.mrb[0].mxu0
        %v1337 = vadd.f32 0.0, %v1336
        %v1338 = vpop.f32.mrb[0].mxu0
        %v1339 = vadd.f32 0.0, %v1338
        %1340 = vmatprep.mubr.bf16.mxu0 0
        %1341 = vmatmul.mubr.bf16.gmra.mrb[0].mxu0 %v732
        %v1342 = vpop.f32.mrb[0].mxu0
        %v1343 = vadd.f32 0.0, %v1342
        %v1344 = vpop.f32.mrb[0].mxu0
        %v1345 = vadd.f32 0.0, %v1344
        %v1346 = vpop.f32.mrb[0].mxu0
        %v1347 = vadd.f32 0.0, %v1346
        %v1348 = vpop.f32.mrb[0].mxu0
        %v1349 = vadd.f32 0.0, %v1348
        %1350 = vmatprep.mubr.bf16.mxu0 0
        %1351 = vmatmul.mubr.bf16.gmra.mrb[0].mxu0 %v733
        %v1352 = vpop.f32.mrb[0].mxu0
        %v1353 = vadd.f32 0.0, %v1352
        %v1354 = vpop.f32.mrb[0].mxu0
        %v1355 = vadd.f32 0.0, %v1354
        %v1356 = vpop.f32.mrb[0].mxu0
        %v1357 = vpop.f32.mrb[0].mxu0
        %1358 = vdwg.mxu0
        %1359 = vmatprep.subr.bf16.mxu0 %v1045
        %1360 = vmatpush1.bf16.msra.mxu0 %v1044
        %1361 = vmatprep.subr.bf16.mxu0 %v1054
        %1362 = vmatpush1.bf16.msra.mxu0 %v1053
        %1363 = vmatprep.subr.bf16.mxu0 %v1063
        %1364 = vmatpush1.bf16.msra.mxu0 %v1062
        %1365 = vmatprep.subr.bf16.mxu0 %v1072
        %1366 = vmatpush1.bf16.msra.mxu0 %v1071
        %1367 = vmatprep.subr.bf16.mxu0 %v1081
        %1368 = vmatpush1.bf16.msra.mxu0 %v1080
        %1369 = vmatprep.subr.bf16.mxu0 %v1090
        %1370 = vmatpush1.bf16.msra.mxu0 %v1089
        %1371 = vmatprep.subr.bf16.mxu0 %v1099
        %1372 = vmatpush1.bf16.msra.mxu0 %v1098
        %1373 = vmatprep.subr.bf16.mxu0 %v1108
        %1374 = vmatpush1.bf16.msra.mxu0 %v1107
        %1375 = vmatprep.subr.bf16.mxu0 0
        %1376 = vmatpush1.bf16.msra.mxu0 0
        %1377 = vmatprep.subr.bf16.mxu0 0
        %1378 = vmatpush1.bf16.msra.mxu0 0
        %1379 = vmatprep.subr.bf16.mxu0 0
        %1380 = vmatpush1.bf16.msra.mxu0 0
        %1381 = vmatprep.subr.bf16.mxu0 0
        %1382 = vmatpush1.bf16.msra.mxu0 0
        %1383 = vmatprep.subr.bf16.mxu0 0
        %1384 = vmatpush1.bf16.msra.mxu0 0
        %1385 = vmatprep.subr.bf16.mxu0 0
        %1386 = vmatpush1.bf16.msra.mxu0 0
        %1387 = vmatprep.subr.bf16.mxu0 0
        %1388 = vmatpush1.bf16.msra.mxu0 0
        %1389 = vmatprep.subr.bf16.mxu0 0
        %1390 = vmatpush1.bf16.msra.mxu0 0
        %1391 = vmatprep.mubr.bf16.mxu0 0
        %1392 = vmatmul.mubr.bf16.gmra.mrb[0].mxu0 %v731
        %v1393 = vpop.f32.mrb[0].mxu0
        %v1394 = vpop.f32.mrb[0].mxu0
        %v1395 = vpop.f32.mrb[0].mxu0
        %v1396 = vpop.f32.mrb[0].mxu0
        %1397 = vmatprep.mubr.bf16.mxu0 0
        %1398 = vmatmul.mubr.bf16.gmra.mrb[0].mxu0 %v732
        %v1399 = vpop.f32.mrb[0].mxu0
        %v1400 = vadd.f32 0.0, %v1399
        %v1401 = vpop.f32.mrb[0].mxu0
        %v1402 = vadd.f32 0.0, %v1401
        %v1403 = vpop.f32.mrb[0].mxu0
        %v1404 = vadd.f32 0.0, %v1403
        %v1405 = vpop.f32.mrb[0].mxu0
        %v1406 = vadd.f32 0.0, %v1405
        %1407 = vmatprep.mubr.bf16.mxu0 0
        %1408 = vmatmul.mubr.bf16.gmra.mrb[0].mxu0 %v733
        %v1409 = vpop.f32.mrb[0].mxu0
        %v1410 = vadd.f32 0.0, %v1409
        %v1411 = vpop.f32.mrb[0].mxu0
        %v1412 = vadd.f32 0.0, %v1411
        %v1413 = vpop.f32.mrb[0].mxu0
        %v1414 = vadd.f32 0.0, %v1413
        %v1415 = vpop.f32.mrb[0].mxu0
        %v1416 = vadd.f32 0.0, %v1415
        %1417 = vdwg.mxu0
        %1418 = vmatprep.subr.bf16.mxu0 0
        %1419 = vmatpush1.bf16.msra.mxu0 %v1046
        %1420 = vmatprep.subr.bf16.mxu0 0
        %1421 = vmatpush1.bf16.msra.mxu0 %v1055
        %1422 = vmatprep.subr.bf16.mxu0 0
        %1423 = vmatpush1.bf16.msra.mxu0 %v1064
        %1424 = vmatprep.subr.bf16.mxu0 0
        %1425 = vmatpush1.bf16.msra.mxu0 %v1073
        %1426 = vmatprep.subr.bf16.mxu0 0
        %1427 = vmatpush1.bf16.msra.mxu0 %v1082
        %1428 = vmatprep.subr.bf16.mxu0 0
        %1429 = vmatpush1.bf16.msra.mxu0 %v1091
        %1430 = vmatprep.subr.bf16.mxu0 0
        %1431 = vmatpush1.bf16.msra.mxu0 %v1100
        %1432 = vmatprep.subr.bf16.mxu0 0
        %1433 = vmatpush1.bf16.msra.mxu0 %v1109
        %1434 = vmatprep.subr.bf16.mxu0 0
        %1435 = vmatpush1.bf16.msra.mxu0 0
        %1436 = vmatprep.subr.bf16.mxu0 0
        %1437 = vmatpush1.bf16.msra.mxu0 0
        %1438 = vmatprep.subr.bf16.mxu0 0
        %1439 = vmatpush1.bf16.msra.mxu0 0
        %1440 = vmatprep.subr.bf16.mxu0 0
        %1441 = vmatpush1.bf16.msra.mxu0 0
        %1442 = vmatprep.subr.bf16.mxu0 0
        %1443 = vmatpush1.bf16.msra.mxu0 0
        %1444 = vmatprep.subr.bf16.mxu0 0
        %1445 = vmatpush1.bf16.msra.mxu0 0
        %1446 = vmatprep.subr.bf16.mxu0 0
        %1447 = vmatpush1.bf16.msra.mxu0 0
        %1448 = vmatprep.subr.bf16.mxu0 0
        %1449 = vmatpush1.bf16.msra.mxu0 0
        %1450 = vmatprep.mubr.bf16.mxu0 0
        %1451 = vmatmul.mubr.bf16.gmra.mrb[0].mxu0 %v731
        %v1452 = vpop.f32.mrb[0].mxu0
        %v1453 = vpop.f32.mrb[0].mxu0
        %v1454 = vpop.f32.mrb[0].mxu0
        %v1455 = vpop.f32.mrb[0].mxu0
        %1456 = vmatprep.mubr.bf16.mxu0 0
        %1457 = vmatmul.mubr.bf16.gmra.mrb[0].mxu0 %v732
        %v1458 = vpop.f32.mrb[0].mxu0
        %v1459 = vadd.f32 0.0, %v1458
        %v1460 = vpop.f32.mrb[0].mxu0
        %v1461 = vpop.f32.mrb[0].mxu0
        %v1462 = vadd.f32 0.0, %v1461
        %v1463 = vpop.f32.mrb[0].mxu0
        %1464 = vmatprep.mubr.bf16.mxu0 0
        %1465 = vmatmul.mubr.bf16.gmra.mrb[0].mxu0 %v733
        %v1466 = vpop.f32.mrb[0].mxu0
        %v1467 = vadd.f32 0.0, %v1466
        %v1468 = vpop.f32.mrb[0].mxu0
        %v1469 = vpop.f32.mrb[0].mxu0
        %v1470 = vadd.f32 0.0, %v1469
        %v1471 = vpop.f32.mrb[0].mxu0
        %1472 = vdwg.mxu0
        %v1477 = vrot.slane %v1219, 1
        %v1478 = vrot.slane %v1223, 1
        %v1479 = vrot.slane %v1229, 1
        %v1480 = vrot.slane %v1233, 1
        %v1485 = vadd.f32 %v1217, %v1477
        %v1486 = vadd.f32 %v1221, %v1478
        %v1487 = vadd.f32 %v1227, %v1479
        %v1488 = vadd.f32 %v1231, %v1480
        %v1493 = vrot.slane %v1276, 2
        %v1494 = vrot.slane %v1279, 2
        %v1495 = vrot.slane %v1285, 2
        %v1496 = vrot.slane %v1289, 2
        %v1501 = vadd.f32 %v1485, %v1493
        %v1502 = vadd.f32 %v1486, %v1494
        %v1503 = vadd.f32 %v1487, %v1495
        %v1504 = vadd.f32 %v1488, %v1496
        %v1505 = vadd.f32 %v1501, %v1281
        %v1506 = vadd.f32 %v1502, %v1287
        %v1507 = vadd.f32 %v1503, %v1291
        %v1508 = vadd.f32 %v1504, %v1296
        %v1513 = vrot.slane %v1337, 1
        %v1514 = vrot.slane %v1343, 1
        %v1515 = vrot.slane %v1347, 1
        %v1516 = vrot.slane %v1353, 1
        %v1521 = vadd.f32 %v1505, %v1513
        %v1522 = vadd.f32 %v1506, %v1514
        %v1523 = vadd.f32 %v1507, %v1515
        %v1524 = vadd.f32 %v1508, %v1516
        %v1529 = vrot.slane %v1339, 2
        %v1530 = vrot.slane %v1345, 2
        %v1531 = vrot.slane %v1349, 2
        %v1532 = vrot.slane %v1355, 2
        %v1537 = vadd.f32 %v1521, %v1529
        %v1538 = vadd.f32 %v1522, %v1530
        %v1539 = vadd.f32 %v1523, %v1531
        %v1540 = vadd.f32 %v1524, %v1532
        %v1541 = vadd.f32 %v1537, %v1400
        %v1542 = vadd.f32 %v1538, %v1404
        %v1543 = vadd.f32 %v1539, %v1410
        %v1544 = vadd.f32 %v1540, %v1414
        %v1549 = vrot.slane %v1402, 1
        %v1550 = vrot.slane %v1406, 1
        %v1551 = vrot.slane %v1412, 1
        %v1552 = vrot.slane %v1416, 1
        %v1557 = vadd.f32 %v1541, %v1549
        %v1558 = vadd.f32 %v1542, %v1550
        %v1559 = vadd.f32 %v1543, %v1551
        %v1560 = vadd.f32 %v1544, %v1552
        %v1565 = vrot.slane %v1459, 2
        %v1566 = vrot.slane %v1462, 2
        %v1567 = vrot.slane %v1467, 2
        %v1568 = vrot.slane %v1470, 2
        %v1573 = vadd.f32 %v1557, %v1565
        %v1574 = vadd.f32 %v1558, %v1566
        %v1575 = vadd.f32 %v1559, %v1567
        %v1576 = vadd.f32 %v1560, %v1568
        %v1577 = vld [vmem:[%s4] sm:$0x1]
        %v1579 = vlaneseq
        %v1580 = vshrl.u32 %v1579, 7
        %v1581 = vsub.s32 0, %v1580
        %v1582 = vrot.slane %v1577, %v1581
        %v1584 = vadd.f32 %v1573, %v1582
        %v1585 = vadd.f32 %v1574, %v1582
        %v1586 = vadd.f32 %v1575, %v1582
        %v1587 = vadd.f32 %v1576, %v1582
        %v1588 = vmax.f32 %v1584, 0.0
        %v1589 = vmax.f32 %v1585, 0.0
        %v1590 = vmax.f32 %v1586, 0.0
        %v1591 = vmax.f32 %v1587, 0.0
        %1592 = vst [vmem:[#allocation3] sm:$0xff] 0.0
        %1593 = vst [vmem:[#allocation3 + $0x8] sm:$0xff] 0.0
        %1594 = vst [vmem:[#allocation3 + $0x10] sm:$0xff] 0.0
        %1595 = vst [vmem:[#allocation3 + $0x18] sm:$0xff] 0.0
        %1596 = vst [vmem:[#allocation3 + $0x20] sm:$0xff] 0.0
        %1597 = vst [vmem:[#allocation3 + $0x28] sm:$0xff] 0.0
        %s1598 = scalar_lea.vmem [#allocation3], 8
        %1599 = vst [vmem:[%s1598 + $0x1] sm:$0xf] %v1588
        %1600 = vst [vmem:[%s1598 + $0x9] sm:$0xf] %v1589
        %1601 = vst [vmem:[%s1598 + $0x11] sm:$0xf] %v1590
        %1602 = vst [vmem:[%s1598 + $0x19] sm:$0xf] %v1591
        %v1603 = vld [vmem:[#allocation3] sm:$0xff]
        %v1604 = vld [vmem:[#allocation3 + $0x8] sm:$0xff]
        %v1605 = vld [vmem:[#allocation3 + $0x10] sm:$0xff]
        %v1606 = vld [vmem:[#allocation3 + $0x18] sm:$0xff]
        %v1607 = vld [vmem:[#allocation3 + $0x20] sm:$0xff]
        %v1608 = vld [vmem:[#allocation3 + $0x28] sm:$0xff]
        %v1609 = vpack.c.bf16 %v1604, %v1603
        %v1610 = vpack.c.bf16 %v1606, %v1605
        %v1611 = vpack.c.bf16 %v1608, %v1607
        %v1612 = vld [vmem:[#allocation10] sm:$0xff]
        %v1613 = vld [vmem:[#allocation10 + $0x8] sm:$0xff]
        %v1614 = vld [vmem:[#allocation10 + $0x10] sm:$0xff]
        %v1615 = vld [vmem:[#allocation10 + $0x18] sm:$0xff]
        %v1616 = vld [vmem:[#allocation10 + $0x20] sm:$0xf]
        %v1617 = vld [vmem:[#allocation10 + $0x24] sm:$0xff]
        %v1618 = vld [vmem:[#allocation10 + $0x2c] sm:$0xff]
        %v1619 = vld [vmem:[#allocation10 + $0x34] sm:$0xff]
        %v1620 = vld [vmem:[#allocation10 + $0x3c] sm:$0xff]
        %v1621 = vld [vmem:[#allocation10 + $0x44] sm:$0xf]
        %v1622 = vld [vmem:[#allocation10 + $0x48] sm:$0xff]
        %v1623 = vld [vmem:[#allocation10 + $0x50] sm:$0xff]
        %v1624 = vld [vmem:[#allocation10 + $0x58] sm:$0xff]
        %v1625 = vld [vmem:[#allocation10 + $0x60] sm:$0xff]
        %v1626 = vld [vmem:[#allocation10 + $0x68] sm:$0xf]
        %v1627 = vld [vmem:[#allocation10 + $0x6c] sm:$0xff]
        %v1628 = vld [vmem:[#allocation10 + $0x74] sm:$0xff]
        %v1629 = vld [vmem:[#allocation10 + $0x7c] sm:$0xff]
        %v1630 = vld [vmem:[#allocation10 + $0x84] sm:$0xff]
        %v1631 = vld [vmem:[#allocation10 + $0x8c] sm:$0xf]
        %v1632 = vld [vmem:[#allocation10 + $0x90] sm:$0xff]
        %v1633 = vld [vmem:[#allocation10 + $0x98] sm:$0xff]
        %v1634 = vld [vmem:[#allocation10 + $0xa0] sm:$0xff]
        %v1635 = vld [vmem:[#allocation10 + $0xa8] sm:$0xff]
        %v1636 = vld [vmem:[#allocation10 + $0xb0] sm:$0xf]
        %v1637 = vld [vmem:[#allocation10 + $0xb4] sm:$0xff]
        %v1638 = vld [vmem:[#allocation10 + $0xbc] sm:$0xff]
        %v1639 = vld [vmem:[#allocation10 + $0xc4] sm:$0xff]
        %v1640 = vld [vmem:[#allocation10 + $0xcc] sm:$0xff]
        %v1641 = vld [vmem:[#allocation10 + $0xd4] sm:$0xf]
        %v1642 = vld [vmem:[#allocation10 + $0xd8] sm:$0xff]
        %v1643 = vld [vmem:[#allocation10 + $0xe0] sm:$0xff]
        %v1644 = vld [vmem:[#allocation10 + $0xe8] sm:$0xff]
        %v1645 = vld [vmem:[#allocation10 + $0xf0] sm:$0xff]
        %v1646 = vld [vmem:[#allocation10 + $0xf8] sm:$0xf]
        %v1647 = vld [vmem:[#allocation10 + $0xfc] sm:$0xff]
        %v1648 = vld [vmem:[#allocation10 + $0x104] sm:$0xff]
        %v1649 = vld [vmem:[#allocation10 + $0x10c] sm:$0xff]
        %v1650 = vld [vmem:[#allocation10 + $0x114] sm:$0xff]
        %v1651 = vld [vmem:[#allocation10 + $0x11c] sm:$0xf]
        %v1652 = vld [vmem:[#allocation10 + $0x120] sm:$0xff]
        %v1653 = vld [vmem:[#allocation10 + $0x128] sm:$0xff]
        %v1654 = vld [vmem:[#allocation10 + $0x130] sm:$0xff]
        %v1655 = vld [vmem:[#allocation10 + $0x138] sm:$0xff]
        %v1656 = vld [vmem:[#allocation10 + $0x140] sm:$0xf]
        %v1657 = vld [vmem:[#allocation10 + $0x144] sm:$0xff]
        %v1658 = vld [vmem:[#allocation10 + $0x14c] sm:$0xff]
        %v1659 = vld [vmem:[#allocation10 + $0x154] sm:$0xff]
        %v1660 = vld [vmem:[#allocation10 + $0x15c] sm:$0xff]
        %v1661 = vld [vmem:[#allocation10 + $0x164] sm:$0xf]
        %v1662 = vld [vmem:[#allocation10 + $0x168] sm:$0xff]
        %v1663 = vld [vmem:[#allocation10 + $0x170] sm:$0xff]
        %v1664 = vld [vmem:[#allocation10 + $0x178] sm:$0xff]
        %v1665 = vld [vmem:[#allocation10 + $0x180] sm:$0xff]
        %v1666 = vld [vmem:[#allocation10 + $0x188] sm:$0xf]
        %v1667 = vld [vmem:[#allocation10 + $0x18c] sm:$0xff]
        %v1668 = vld [vmem:[#allocation10 + $0x194] sm:$0xff]
        %v1669 = vld [vmem:[#allocation10 + $0x19c] sm:$0xff]
        %v1670 = vld [vmem:[#allocation10 + $0x1a4] sm:$0xff]
        %v1671 = vld [vmem:[#allocation10 + $0x1ac] sm:$0xf]
        %v1672 = vld [vmem:[#allocation10 + $0x1b0] sm:$0xff]
        %v1673 = vld [vmem:[#allocation10 + $0x1b8] sm:$0xff]
        %v1674 = vld [vmem:[#allocation10 + $0x1c0] sm:$0xff]
        %v1675 = vld [vmem:[#allocation10 + $0x1c8] sm:$0xff]
        %v1676 = vld [vmem:[#allocation10 + $0x1d0] sm:$0xf]
        %v1677 = vld [vmem:[#allocation10 + $0x1d4] sm:$0xff]
        %v1678 = vld [vmem:[#allocation10 + $0x1dc] sm:$0xff]
        %v1679 = vld [vmem:[#allocation10 + $0x1e4] sm:$0xff]
        %v1680 = vld [vmem:[#allocation10 + $0x1ec] sm:$0xff]
        %v1681 = vld [vmem:[#allocation10 + $0x1f4] sm:$0xf]
        %v1682 = vld [vmem:[#allocation10 + $0x1f8] sm:$0xff]
        %v1683 = vld [vmem:[#allocation10 + $0x200] sm:$0xff]
        %v1684 = vld [vmem:[#allocation10 + $0x208] sm:$0xff]
        %v1685 = vld [vmem:[#allocation10 + $0x210] sm:$0xff]
        %v1686 = vld [vmem:[#allocation10 + $0x218] sm:$0xf]
        %v1687 = vld [vmem:[#allocation10 + $0x21c] sm:$0xff]
        %v1688 = vld [vmem:[#allocation10 + $0x224] sm:$0xff]
        %v1689 = vld [vmem:[#allocation10 + $0x22c] sm:$0xff]
        %v1690 = vld [vmem:[#allocation10 + $0x234] sm:$0xff]
        %v1691 = vld [vmem:[#allocation10 + $0x23c] sm:$0xf]
        %v1772 = vunpack.c.l.b16 %v1612
        %v1773 = vunpack.c.h.b16 %v1612
        %v1774 = vunpack.c.l.b16 %v1613
        %v1775 = vunpack.c.h.b16 %v1613
        %v1776 = vunpack.c.l.b16 %v1614
        %v1777 = vunpack.c.h.b16 %v1614
        %v1778 = vunpack.c.l.b16 %v1615
        %v1779 = vunpack.c.h.b16 %v1615
        %v1780 = vunpack.c.l.b16 %v1616
        %v1781 = vunpack.c.l.b16 %v1617
        %v1782 = vunpack.c.h.b16 %v1617
        %v1783 = vunpack.c.l.b16 %v1618
        %v1784 = vunpack.c.h.b16 %v1618
        %v1785 = vunpack.c.l.b16 %v1619
        %v1786 = vunpack.c.h.b16 %v1619
        %v1787 = vunpack.c.l.b16 %v1620
        %v1788 = vunpack.c.h.b16 %v1620
        %v1789 = vunpack.c.l.b16 %v1621
        %v1790 = vunpack.c.l.b16 %v1622
        %v1791 = vunpack.c.h.b16 %v1622
        %v1792 = vunpack.c.l.b16 %v1623
        %v1793 = vunpack.c.h.b16 %v1623
        %v1794 = vunpack.c.l.b16 %v1624
        %v1795 = vunpack.c.h.b16 %v1624
        %v1796 = vunpack.c.l.b16 %v1625
        %v1797 = vunpack.c.h.b16 %v1625
        %v1798 = vunpack.c.l.b16 %v1626
        %v1799 = vunpack.c.l.b16 %v1627
        %v1800 = vunpack.c.h.b16 %v1627
        %v1801 = vunpack.c.l.b16 %v1628
        %v1802 = vunpack.c.h.b16 %v1628
        %v1803 = vunpack.c.l.b16 %v1629
        %v1804 = vunpack.c.h.b16 %v1629
        %v1805 = vunpack.c.l.b16 %v1630
        %v1806 = vunpack.c.h.b16 %v1630
        %v1807 = vunpack.c.l.b16 %v1631
        %v1808 = vunpack.c.l.b16 %v1632
        %v1809 = vunpack.c.h.b16 %v1632
        %v1810 = vunpack.c.l.b16 %v1633
        %v1811 = vunpack.c.h.b16 %v1633
        %v1812 = vunpack.c.l.b16 %v1634
        %v1813 = vunpack.c.h.b16 %v1634
        %v1814 = vunpack.c.l.b16 %v1635
        %v1815 = vunpack.c.h.b16 %v1635
        %v1816 = vunpack.c.l.b16 %v1636
        %v1817 = vunpack.c.l.b16 %v1637
        %v1818 = vunpack.c.h.b16 %v1637
        %v1819 = vunpack.c.l.b16 %v1638
        %v1820 = vunpack.c.h.b16 %v1638
        %v1821 = vunpack.c.l.b16 %v1639
        %v1822 = vunpack.c.h.b16 %v1639
        %v1823 = vunpack.c.l.b16 %v1640
        %v1824 = vunpack.c.h.b16 %v1640
        %v1825 = vunpack.c.l.b16 %v1641
        %v1826 = vunpack.c.l.b16 %v1642
        %v1827 = vunpack.c.h.b16 %v1642
        %v1828 = vunpack.c.l.b16 %v1643
        %v1829 = vunpack.c.h.b16 %v1643
        %v1830 = vunpack.c.l.b16 %v1644
        %v1831 = vunpack.c.h.b16 %v1644
        %v1832 = vunpack.c.l.b16 %v1645
        %v1833 = vunpack.c.h.b16 %v1645
        %v1834 = vunpack.c.l.b16 %v1646
        %v1835 = vunpack.c.l.b16 %v1647
        %v1836 = vunpack.c.h.b16 %v1647
        %v1837 = vunpack.c.l.b16 %v1648
        %v1838 = vunpack.c.h.b16 %v1648
        %v1839 = vunpack.c.l.b16 %v1649
        %v1840 = vunpack.c.h.b16 %v1649
        %v1841 = vunpack.c.l.b16 %v1650
        %v1842 = vunpack.c.h.b16 %v1650
        %v1843 = vunpack.c.l.b16 %v1651
        %v1844 = vunpack.c.l.b16 %v1652
        %v1845 = vunpack.c.h.b16 %v1652
        %v1846 = vunpack.c.l.b16 %v1653
        %v1847 = vunpack.c.h.b16 %v1653
        %v1848 = vunpack.c.l.b16 %v1654
        %v1849 = vunpack.c.h.b16 %v1654
        %v1850 = vunpack.c.l.b16 %v1655
        %v1851 = vunpack.c.h.b16 %v1655
        %v1852 = vunpack.c.l.b16 %v1656
        %v1853 = vunpack.c.l.b16 %v1657
        %v1854 = vunpack.c.h.b16 %v1657
        %v1855 = vunpack.c.l.b16 %v1658
        %v1856 = vunpack.c.h.b16 %v1658
        %v1857 = vunpack.c.l.b16 %v1659
        %v1858 = vunpack.c.h.b16 %v1659
        %v1859 = vunpack.c.l.b16 %v1660
        %v1860 = vunpack.c.h.b16 %v1660
        %v1861 = vunpack.c.l.b16 %v1661
        %v1862 = vunpack.c.l.b16 %v1662
        %v1863 = vunpack.c.h.b16 %v1662
        %v1864 = vunpack.c.l.b16 %v1663
        %v1865 = vunpack.c.h.b16 %v1663
        %v1866 = vunpack.c.l.b16 %v1664
        %v1867 = vunpack.c.h.b16 %v1664
        %v1868 = vunpack.c.l.b16 %v1665
        %v1869 = vunpack.c.h.b16 %v1665
        %v1870 = vunpack.c.l.b16 %v1666
        %v1871 = vunpack.c.l.b16 %v1667
        %v1872 = vunpack.c.h.b16 %v1667
        %v1873 = vunpack.c.l.b16 %v1668
        %v1874 = vunpack.c.h.b16 %v1668
        %v1875 = vunpack.c.l.b16 %v1669
        %v1876 = vunpack.c.h.b16 %v1669
        %v1877 = vunpack.c.l.b16 %v1670
        %v1878 = vunpack.c.h.b16 %v1670
        %v1879 = vunpack.c.l.b16 %v1671
        %v1880 = vunpack.c.l.b16 %v1672
        %v1881 = vunpack.c.h.b16 %v1672
        %v1882 = vunpack.c.l.b16 %v1673
        %v1883 = vunpack.c.h.b16 %v1673
        %v1884 = vunpack.c.l.b16 %v1674
        %v1885 = vunpack.c.h.b16 %v1674
        %v1886 = vunpack.c.l.b16 %v1675
        %v1887 = vunpack.c.h.b16 %v1675
        %v1888 = vunpack.c.l.b16 %v1676
        %v1889 = vunpack.c.l.b16 %v1677
        %v1890 = vunpack.c.h.b16 %v1677
        %v1891 = vunpack.c.l.b16 %v1678
        %v1892 = vunpack.c.h.b16 %v1678
        %v1893 = vunpack.c.l.b16 %v1679
        %v1894 = vunpack.c.h.b16 %v1679
        %v1895 = vunpack.c.l.b16 %v1680
        %v1896 = vunpack.c.h.b16 %v1680
        %v1897 = vunpack.c.l.b16 %v1681
        %v1898 = vunpack.c.l.b16 %v1682
        %v1899 = vunpack.c.h.b16 %v1682
        %v1900 = vunpack.c.l.b16 %v1683
        %v1901 = vunpack.c.h.b16 %v1683
        %v1902 = vunpack.c.l.b16 %v1684
        %v1903 = vunpack.c.h.b16 %v1684
        %v1904 = vunpack.c.l.b16 %v1685
        %v1905 = vunpack.c.h.b16 %v1685
        %v1906 = vunpack.c.l.b16 %v1686
        %v1907 = vunpack.c.l.b16 %v1687
        %v1908 = vunpack.c.h.b16 %v1687
        %v1909 = vunpack.c.l.b16 %v1688
        %v1910 = vunpack.c.h.b16 %v1688
        %v1911 = vunpack.c.l.b16 %v1689
        %v1912 = vunpack.c.h.b16 %v1689
        %v1913 = vunpack.c.l.b16 %v1690
        %v1914 = vunpack.c.h.b16 %v1690
        %v1915 = vunpack.c.l.b16 %v1691
        %v1916 = vpack.c.b16 %v1781, %v1772
        %v1917 = vpack.c.b16 %v1782, %v1773
        %v1918 = vpack.c.b16 %v1783, %v1774
        %v1919 = vpack.c.b16 %v1784, %v1775
        %v1920 = vpack.c.b16 %v1785, %v1776
        %v1921 = vpack.c.b16 %v1786, %v1777
        %v1922 = vpack.c.b16 %v1787, %v1778
        %v1923 = vpack.c.b16 %v1788, %v1779
        %v1924 = vpack.c.b16 %v1789, %v1780
        %v1925 = vpack.c.b16 %v1799, %v1790
        %v1926 = vpack.c.b16 %v1800, %v1791
        %v1927 = vpack.c.b16 %v1801, %v1792
        %v1928 = vpack.c.b16 %v1802, %v1793
        %v1929 = vpack.c.b16 %v1803, %v1794
        %v1930 = vpack.c.b16 %v1804, %v1795
        %v1931 = vpack.c.b16 %v1805, %v1796
        %v1932 = vpack.c.b16 %v1806, %v1797
        %v1933 = vpack.c.b16 %v1807, %v1798
        %v1934 = vpack.c.b16 %v1817, %v1808
        %v1935 = vpack.c.b16 %v1818, %v1809
        %v1936 = vpack.c.b16 %v1819, %v1810
        %v1937 = vpack.c.b16 %v1820, %v1811
        %v1938 = vpack.c.b16 %v1821, %v1812
        %v1939 = vpack.c.b16 %v1822, %v1813
        %v1940 = vpack.c.b16 %v1823, %v1814
        %v1941 = vpack.c.b16 %v1824, %v1815
        %v1942 = vpack.c.b16 %v1825, %v1816
        %v1943 = vpack.c.b16 %v1835, %v1826
        %v1944 = vpack.c.b16 %v1836, %v1827
        %v1945 = vpack.c.b16 %v1837, %v1828
        %v1946 = vpack.c.b16 %v1838, %v1829
        %v1947 = vpack.c.b16 %v1839, %v1830
        %v1948 = vpack.c.b16 %v1840, %v1831
        %v1949 = vpack.c.b16 %v1841, %v1832
        %v1950 = vpack.c.b16 %v1842, %v1833
        %v1951 = vpack.c.b16 %v1843, %v1834
        %v1952 = vpack.c.b16 %v1853, %v1844
        %v1953 = vpack.c.b16 %v1854, %v1845
        %v1954 = vpack.c.b16 %v1855, %v1846
        %v1955 = vpack.c.b16 %v1856, %v1847
        %v1956 = vpack.c.b16 %v1857, %v1848
        %v1957 = vpack.c.b16 %v1858, %v1849
        %v1958 = vpack.c.b16 %v1859, %v1850
        %v1959 = vpack.c.b16 %v1860, %v1851
        %v1960 = vpack.c.b16 %v1861, %v1852
        %v1961 = vpack.c.b16 %v1871, %v1862
        %v1962 = vpack.c.b16 %v1872, %v1863
        %v1963 = vpack.c.b16 %v1873, %v1864
        %v1964 = vpack.c.b16 %v1874, %v1865
        %v1965 = vpack.c.b16 %v1875, %v1866
        %v1966 = vpack.c.b16 %v1876, %v1867
        %v1967 = vpack.c.b16 %v1877, %v1868
        %v1968 = vpack.c.b16 %v1878, %v1869
        %v1969 = vpack.c.b16 %v1879, %v1870
        %v1970 = vpack.c.b16 %v1889, %v1880
        %v1971 = vpack.c.b16 %v1890, %v1881
        %v1972 = vpack.c.b16 %v1891, %v1882
        %v1973 = vpack.c.b16 %v1892, %v1883
        %v1974 = vpack.c.b16 %v1893, %v1884
        %v1975 = vpack.c.b16 %v1894, %v1885
        %v1976 = vpack.c.b16 %v1895, %v1886
        %v1977 = vpack.c.b16 %v1896, %v1887
        %v1978 = vpack.c.b16 %v1897, %v1888
        %v1979 = vpack.c.b16 %v1907, %v1898
        %v1980 = vpack.c.b16 %v1908, %v1899
        %v1981 = vpack.c.b16 %v1909, %v1900
        %v1982 = vpack.c.b16 %v1910, %v1901
        %v1983 = vpack.c.b16 %v1911, %v1902
        %v1984 = vpack.c.b16 %v1912, %v1903
        %v1985 = vpack.c.b16 %v1913, %v1904
        %v1986 = vpack.c.b16 %v1914, %v1905
        %v1987 = vpack.c.b16 %v1915, %v1906
        %2060 = vmatprep.subr.bf16.mxu0 %v1917
        %2061 = vmatpush1.bf16.msra.mxu0 %v1916
        %2062 = vmatprep.subr.bf16.mxu0 %v1926
        %2063 = vmatpush1.bf16.msra.mxu0 %v1925
        %2064 = vmatprep.subr.bf16.mxu0 %v1935
        %2065 = vmatpush1.bf16.msra.mxu0 %v1934
        %2066 = vmatprep.subr.bf16.mxu0 %v1944
        %2067 = vmatpush1.bf16.msra.mxu0 %v1943
        %2068 = vmatprep.subr.bf16.mxu0 %v1953
        %2069 = vmatpush1.bf16.msra.mxu0 %v1952
        %2070 = vmatprep.subr.bf16.mxu0 %v1962
        %2071 = vmatpush1.bf16.msra.mxu0 %v1961
        %2072 = vmatprep.subr.bf16.mxu0 %v1971
        %2073 = vmatpush1.bf16.msra.mxu0 %v1970
        %2074 = vmatprep.subr.bf16.mxu0 %v1980
        %2075 = vmatpush1.bf16.msra.mxu0 %v1979
        %2076 = vmatprep.subr.bf16.mxu0 0
        %2077 = vmatpush1.bf16.msra.mxu0 0
        %2078 = vmatprep.subr.bf16.mxu0 0
        %2079 = vmatpush1.bf16.msra.mxu0 0
        %2080 = vmatprep.subr.bf16.mxu0 0
        %2081 = vmatpush1.bf16.msra.mxu0 0
        %2082 = vmatprep.subr.bf16.mxu0 0
        %2083 = vmatpush1.bf16.msra.mxu0 0
        %2084 = vmatprep.subr.bf16.mxu0 0
        %2085 = vmatpush1.bf16.msra.mxu0 0
        %2086 = vmatprep.subr.bf16.mxu0 0
        %2087 = vmatpush1.bf16.msra.mxu0 0
        %2088 = vmatprep.subr.bf16.mxu0 0
        %2089 = vmatpush1.bf16.msra.mxu0 0
        %2090 = vmatprep.subr.bf16.mxu0 0
        %2091 = vmatpush1.bf16.msra.mxu0 0
        %2092 = vmatprep.mubr.bf16.mxu0 0
        %2093 = vmatmul.mubr.bf16.gmra.mrb[0].mxu0 %v1609
        %v2094 = vpop.f32.mrb[0].mxu0
        %v2095 = vadd.f32 0.0, %v2094
        %v2096 = vpop.f32.mrb[0].mxu0
        %v2097 = vadd.f32 0.0, %v2096
        %v2098 = vpop.f32.mrb[0].mxu0
        %v2099 = vadd.f32 0.0, %v2098
        %v2100 = vpop.f32.mrb[0].mxu0
        %v2101 = vadd.f32 0.0, %v2100
        %2102 = vmatprep.mubr.bf16.mxu0 0
        %2103 = vmatmul.mubr.bf16.gmra.mrb[0].mxu0 %v1610
        %v2104 = vpop.f32.mrb[0].mxu0
        %v2105 = vadd.f32 0.0, %v2104
        %v2106 = vpop.f32.mrb[0].mxu0
        %v2107 = vadd.f32 0.0, %v2106
        %v2108 = vpop.f32.mrb[0].mxu0
        %v2109 = vadd.f32 0.0, %v2108
        %v2110 = vpop.f32.mrb[0].mxu0
        %v2111 = vadd.f32 0.0, %v2110
        %2112 = vmatprep.mubr.bf16.mxu0 0
        %2113 = vmatmul.mubr.bf16.gmra.mrb[0].mxu0 %v1611
        %v2114 = vpop.f32.mrb[0].mxu0
        %v2115 = vpop.f32.mrb[0].mxu0
        %v2116 = vpop.f32.mrb[0].mxu0
        %v2117 = vpop.f32.mrb[0].mxu0
        %2118 = vdwg.mxu0
        %2119 = vmatprep.subr.bf16.mxu0 %v1919
        %2120 = vmatpush1.bf16.msra.mxu0 %v1918
        %2121 = vmatprep.subr.bf16.mxu0 %v1928
        %2122 = vmatpush1.bf16.msra.mxu0 %v1927
        %2123 = vmatprep.subr.bf16.mxu0 %v1937
        %2124 = vmatpush1.bf16.msra.mxu0 %v1936
        %2125 = vmatprep.subr.bf16.mxu0 %v1946
        %2126 = vmatpush1.bf16.msra.mxu0 %v1945
        %2127 = vmatprep.subr.bf16.mxu0 %v1955
        %2128 = vmatpush1.bf16.msra.mxu0 %v1954
        %2129 = vmatprep.subr.bf16.mxu0 %v1964
        %2130 = vmatpush1.bf16.msra.mxu0 %v1963
        %2131 = vmatprep.subr.bf16.mxu0 %v1973
        %2132 = vmatpush1.bf16.msra.mxu0 %v1972
        %2133 = vmatprep.subr.bf16.mxu0 %v1982
        %2134 = vmatpush1.bf16.msra.mxu0 %v1981
        %2135 = vmatprep.subr.bf16.mxu0 0
        %2136 = vmatpush1.bf16.msra.mxu0 0
        %2137 = vmatprep.subr.bf16.mxu0 0
        %2138 = vmatpush1.bf16.msra.mxu0 0
        %2139 = vmatprep.subr.bf16.mxu0 0
        %2140 = vmatpush1.bf16.msra.mxu0 0
        %2141 = vmatprep.subr.bf16.mxu0 0
        %2142 = vmatpush1.bf16.msra.mxu0 0
        %2143 = vmatprep.subr.bf16.mxu0 0
        %2144 = vmatpush1.bf16.msra.mxu0 0
        %2145 = vmatprep.subr.bf16.mxu0 0
        %2146 = vmatpush1.bf16.msra.mxu0 0
        %2147 = vmatprep.subr.bf16.mxu0 0
        %2148 = vmatpush1.bf16.msra.mxu0 0
        %2149 = vmatprep.subr.bf16.mxu0 0
        %2150 = vmatpush1.bf16.msra.mxu0 0
        %2151 = vmatprep.mubr.bf16.mxu0 0
        %2152 = vmatmul.mubr.bf16.gmra.mrb[0].mxu0 %v1609
        %v2153 = vpop.f32.mrb[0].mxu0
        %v2154 = vadd.f32 0.0, %v2153
        %v2155 = vpop.f32.mrb[0].mxu0
        %v2156 = vpop.f32.mrb[0].mxu0
        %v2157 = vadd.f32 0.0, %v2156
        %v2158 = vpop.f32.mrb[0].mxu0
        %v2159 = vadd.f32 0.0, %v2158
        %2160 = vmatprep.mubr.bf16.mxu0 0
        %2161 = vmatmul.mubr.bf16.gmra.mrb[0].mxu0 %v1610
        %v2162 = vpop.f32.mrb[0].mxu0
        %v2163 = vadd.f32 0.0, %v2162
        %v2164 = vpop.f32.mrb[0].mxu0
        %v2165 = vadd.f32 0.0, %v2164
        %v2166 = vpop.f32.mrb[0].mxu0
        %v2167 = vadd.f32 0.0, %v2166
        %v2168 = vpop.f32.mrb[0].mxu0
        %v2169 = vadd.f32 0.0, %v2168
        %2170 = vmatprep.mubr.bf16.mxu0 0
        %2171 = vmatmul.mubr.bf16.gmra.mrb[0].mxu0 %v1611
        %v2172 = vpop.f32.mrb[0].mxu0
        %v2173 = vpop.f32.mrb[0].mxu0
        %v2174 = vadd.f32 0.0, %v2173
        %v2175 = vpop.f32.mrb[0].mxu0
        %v2176 = vpop.f32.mrb[0].mxu0
        %2177 = vdwg.mxu0
        %2178 = vmatprep.subr.bf16.mxu0 %v1921
        %2179 = vmatpush1.bf16.msra.mxu0 %v1920
        %2180 = vmatprep.subr.bf16.mxu0 %v1930
        %2181 = vmatpush1.bf16.msra.mxu0 %v1929
        %2182 = vmatprep.subr.bf16.mxu0 %v1939
        %2183 = vmatpush1.bf16.msra.mxu0 %v1938
        %2184 = vmatprep.subr.bf16.mxu0 %v1948
        %2185 = vmatpush1.bf16.msra.mxu0 %v1947
        %2186 = vmatprep.subr.bf16.mxu0 %v1957
        %2187 = vmatpush1.bf16.msra.mxu0 %v1956
        %2188 = vmatprep.subr.bf16.mxu0 %v1966
        %2189 = vmatpush1.bf16.msra.mxu0 %v1965
        %2190 = vmatprep.subr.bf16.mxu0 %v1975
        %2191 = vmatpush1.bf16.msra.mxu0 %v1974
        %2192 = vmatprep.subr.bf16.mxu0 %v1984
        %2193 = vmatpush1.bf16.msra.mxu0 %v1983
        %2194 = vmatprep.subr.bf16.mxu0 0
        %2195 = vmatpush1.bf16.msra.mxu0 0
        %2196 = vmatprep.subr.bf16.mxu0 0
        %2197 = vmatpush1.bf16.msra.mxu0 0
        %2198 = vmatprep.subr.bf16.mxu0 0
        %2199 = vmatpush1.bf16.msra.mxu0 0
        %2200 = vmatprep.subr.bf16.mxu0 0
        %2201 = vmatpush1.bf16.msra.mxu0 0
        %2202 = vmatprep.subr.bf16.mxu0 0
        %2203 = vmatpush1.bf16.msra.mxu0 0
        %2204 = vmatprep.subr.bf16.mxu0 0
        %2205 = vmatpush1.bf16.msra.mxu0 0
        %2206 = vmatprep.subr.bf16.mxu0 0
        %2207 = vmatpush1.bf16.msra.mxu0 0
        %2208 = vmatprep.subr.bf16.mxu0 0
        %2209 = vmatpush1.bf16.msra.mxu0 0
        %2210 = vmatprep.mubr.bf16.mxu0 0
        %2211 = vmatmul.mubr.bf16.gmra.mrb[0].mxu0 %v1609
        %v2212 = vpop.f32.mrb[0].mxu0
        %v2213 = vpop.f32.mrb[0].mxu0
        %v2214 = vpop.f32.mrb[0].mxu0
        %v2215 = vadd.f32 0.0, %v2214
        %v2216 = vpop.f32.mrb[0].mxu0
        %v2217 = vadd.f32 0.0, %v2216
        %2218 = vmatprep.mubr.bf16.mxu0 0
        %2219 = vmatmul.mubr.bf16.gmra.mrb[0].mxu0 %v1610
        %v2220 = vpop.f32.mrb[0].mxu0
        %v2221 = vadd.f32 0.0, %v2220
        %v2222 = vpop.f32.mrb[0].mxu0
        %v2223 = vadd.f32 0.0, %v2222
        %v2224 = vpop.f32.mrb[0].mxu0
        %v2225 = vadd.f32 0.0, %v2224
        %v2226 = vpop.f32.mrb[0].mxu0
        %v2227 = vadd.f32 0.0, %v2226
        %2228 = vmatprep.mubr.bf16.mxu0 0
        %2229 = vmatmul.mubr.bf16.gmra.mrb[0].mxu0 %v1611
        %v2230 = vpop.f32.mrb[0].mxu0
        %v2231 = vadd.f32 0.0, %v2230
        %v2232 = vpop.f32.mrb[0].mxu0
        %v2233 = vadd.f32 0.0, %v2232
        %v2234 = vpop.f32.mrb[0].mxu0
        %v2235 = vpop.f32.mrb[0].mxu0
        %2236 = vdwg.mxu0
        %2237 = vmatprep.subr.bf16.mxu0 %v1923
        %2238 = vmatpush1.bf16.msra.mxu0 %v1922
        %2239 = vmatprep.subr.bf16.mxu0 %v1932
        %2240 = vmatpush1.bf16.msra.mxu0 %v1931
        %2241 = vmatprep.subr.bf16.mxu0 %v1941
        %2242 = vmatpush1.bf16.msra.mxu0 %v1940
        %2243 = vmatprep.subr.bf16.mxu0 %v1950
        %2244 = vmatpush1.bf16.msra.mxu0 %v1949
        %2245 = vmatprep.subr.bf16.mxu0 %v1959
        %2246 = vmatpush1.bf16.msra.mxu0 %v1958
        %2247 = vmatprep.subr.bf16.mxu0 %v1968
        %2248 = vmatpush1.bf16.msra.mxu0 %v1967
        %2249 = vmatprep.subr.bf16.mxu0 %v1977
        %2250 = vmatpush1.bf16.msra.mxu0 %v1976
        %2251 = vmatprep.subr.bf16.mxu0 %v1986
        %2252 = vmatpush1.bf16.msra.mxu0 %v1985
        %2253 = vmatprep.subr.bf16.mxu0 0
        %2254 = vmatpush1.bf16.msra.mxu0 0
        %2255 = vmatprep.subr.bf16.mxu0 0
        %2256 = vmatpush1.bf16.msra.mxu0 0
        %2257 = vmatprep.subr.bf16.mxu0 0
        %2258 = vmatpush1.bf16.msra.mxu0 0
        %2259 = vmatprep.subr.bf16.mxu0 0
        %2260 = vmatpush1.bf16.msra.mxu0 0
        %2261 = vmatprep.subr.bf16.mxu0 0
        %2262 = vmatpush1.bf16.msra.mxu0 0
        %2263 = vmatprep.subr.bf16.mxu0 0
        %2264 = vmatpush1.bf16.msra.mxu0 0
        %2265 = vmatprep.subr.bf16.mxu0 0
        %2266 = vmatpush1.bf16.msra.mxu0 0
        %2267 = vmatprep.subr.bf16.mxu0 0
        %2268 = vmatpush1.bf16.msra.mxu0 0
        %2269 = vmatprep.mubr.bf16.mxu0 0
        %2270 = vmatmul.mubr.bf16.gmra.mrb[0].mxu0 %v1609
        %v2271 = vpop.f32.mrb[0].mxu0
        %v2272 = vpop.f32.mrb[0].mxu0
        %v2273 = vpop.f32.mrb[0].mxu0
        %v2274 = vpop.f32.mrb[0].mxu0
        %2275 = vmatprep.mubr.bf16.mxu0 0
        %2276 = vmatmul.mubr.bf16.gmra.mrb[0].mxu0 %v1610
        %v2277 = vpop.f32.mrb[0].mxu0
        %v2278 = vadd.f32 0.0, %v2277
        %v2279 = vpop.f32.mrb[0].mxu0
        %v2280 = vadd.f32 0.0, %v2279
        %v2281 = vpop.f32.mrb[0].mxu0
        %v2282 = vadd.f32 0.0, %v2281
        %v2283 = vpop.f32.mrb[0].mxu0
        %v2284 = vadd.f32 0.0, %v2283
        %2285 = vmatprep.mubr.bf16.mxu0 0
        %2286 = vmatmul.mubr.bf16.gmra.mrb[0].mxu0 %v1611
        %v2287 = vpop.f32.mrb[0].mxu0
        %v2288 = vadd.f32 0.0, %v2287
        %v2289 = vpop.f32.mrb[0].mxu0
        %v2290 = vadd.f32 0.0, %v2289
        %v2291 = vpop.f32.mrb[0].mxu0
        %v2292 = vadd.f32 0.0, %v2291
        %v2293 = vpop.f32.mrb[0].mxu0
        %v2294 = vadd.f32 0.0, %v2293
        %2295 = vdwg.mxu0
        %2296 = vmatprep.subr.bf16.mxu0 0
        %2297 = vmatpush1.bf16.msra.mxu0 %v1924
        %2298 = vmatprep.subr.bf16.mxu0 0
        %2299 = vmatpush1.bf16.msra.mxu0 %v1933
        %2300 = vmatprep.subr.bf16.mxu0 0
        %2301 = vmatpush1.bf16.msra.mxu0 %v1942
        %2302 = vmatprep.subr.bf16.mxu0 0
        %2303 = vmatpush1.bf16.msra.mxu0 %v1951
        %2304 = vmatprep.subr.bf16.mxu0 0
        %2305 = vmatpush1.bf16.msra.mxu0 %v1960
        %2306 = vmatprep.subr.bf16.mxu0 0
        %2307 = vmatpush1.bf16.msra.mxu0 %v1969
        %2308 = vmatprep.subr.bf16.mxu0 0
        %2309 = vmatpush1.bf16.msra.mxu0 %v1978
        %2310 = vmatprep.subr.bf16.mxu0 0
        %2311 = vmatpush1.bf16.msra.mxu0 %v1987
        %2312 = vmatprep.subr.bf16.mxu0 0
        %2313 = vmatpush1.bf16.msra.mxu0 0
        %2314 = vmatprep.subr.bf16.mxu0 0
        %2315 = vmatpush1.bf16.msra.mxu0 0
        %2316 = vmatprep.subr.bf16.mxu0 0
        %2317 = vmatpush1.bf16.msra.mxu0 0
        %2318 = vmatprep.subr.bf16.mxu0 0
        %2319 = vmatpush1.bf16.msra.mxu0 0
        %2320 = vmatprep.subr.bf16.mxu0 0
        %2321 = vmatpush1.bf16.msra.mxu0 0
        %2322 = vmatprep.subr.bf16.mxu0 0
        %2323 = vmatpush1.bf16.msra.mxu0 0
        %2324 = vmatprep.subr.bf16.mxu0 0
        %2325 = vmatpush1.bf16.msra.mxu0 0
        %2326 = vmatprep.subr.bf16.mxu0 0
        %2327 = vmatpush1.bf16.msra.mxu0 0
        %2328 = vmatprep.mubr.bf16.mxu0 0
        %2329 = vmatmul.mubr.bf16.gmra.mrb[0].mxu0 %v1609
        %v2330 = vpop.f32.mrb[0].mxu0
        %v2331 = vpop.f32.mrb[0].mxu0
        %v2332 = vpop.f32.mrb[0].mxu0
        %v2333 = vpop.f32.mrb[0].mxu0
        %2334 = vmatprep.mubr.bf16.mxu0 0
        %2335 = vmatmul.mubr.bf16.gmra.mrb[0].mxu0 %v1610
        %v2336 = vpop.f32.mrb[0].mxu0
        %v2337 = vadd.f32 0.0, %v2336
        %v2338 = vpop.f32.mrb[0].mxu0
        %v2339 = vpop.f32.mrb[0].mxu0
        %v2340 = vadd.f32 0.0, %v2339
        %v2341 = vpop.f32.mrb[0].mxu0
        %2342 = vmatprep.mubr.bf16.mxu0 0
        %2343 = vmatmul.mubr.bf16.gmra.mrb[0].mxu0 %v1611
        %v2344 = vpop.f32.mrb[0].mxu0
        %v2345 = vadd.f32 0.0, %v2344
        %v2346 = vpop.f32.mrb[0].mxu0
        %v2347 = vpop.f32.mrb[0].mxu0
        %v2348 = vadd.f32 0.0, %v2347
        %v2349 = vpop.f32.mrb[0].mxu0
        %2350 = vdwg.mxu0
        %v2355 = vrot.slane %v2097, 1
        %v2356 = vrot.slane %v2101, 1
        %v2357 = vrot.slane %v2107, 1
        %v2358 = vrot.slane %v2111, 1
        %v2363 = vadd.f32 %v2095, %v2355
        %v2364 = vadd.f32 %v2099, %v2356
        %v2365 = vadd.f32 %v2105, %v2357
        %v2366 = vadd.f32 %v2109, %v2358
        %v2371 = vrot.slane %v2154, 2
        %v2372 = vrot.slane %v2157, 2
        %v2373 = vrot.slane %v2163, 2
        %v2374 = vrot.slane %v2167, 2
        %v2379 = vadd.f32 %v2363, %v2371
        %v2380 = vadd.f32 %v2364, %v2372
        %v2381 = vadd.f32 %v2365, %v2373
        %v2382 = vadd.f32 %v2366, %v2374
        %v2383 = vadd.f32 %v2379, %v2159
        %v2384 = vadd.f32 %v2380, %v2165
        %v2385 = vadd.f32 %v2381, %v2169
        %v2386 = vadd.f32 %v2382, %v2174
        %v2391 = vrot.slane %v2215, 1
        %v2392 = vrot.slane %v2221, 1
        %v2393 = vrot.slane %v2225, 1
        %v2394 = vrot.slane %v2231, 1
        %v2399 = vadd.f32 %v2383, %v2391
        %v2400 = vadd.f32 %v2384, %v2392
        %v2401 = vadd.f32 %v2385, %v2393
        %v2402 = vadd.f32 %v2386, %v2394
        %v2407 = vrot.slane %v2217, 2
        %v2408 = vrot.slane %v2223, 2
        %v2409 = vrot.slane %v2227, 2
        %v2410 = vrot.slane %v2233, 2
        %v2415 = vadd.f32 %v2399, %v2407
        %v2416 = vadd.f32 %v2400, %v2408
        %v2417 = vadd.f32 %v2401, %v2409
        %v2418 = vadd.f32 %v2402, %v2410
        %v2419 = vadd.f32 %v2415, %v2278
        %v2420 = vadd.f32 %v2416, %v2282
        %v2421 = vadd.f32 %v2417, %v2288
        %v2422 = vadd.f32 %v2418, %v2292
        %v2427 = vrot.slane %v2280, 1
        %v2428 = vrot.slane %v2284, 1
        %v2429 = vrot.slane %v2290, 1
        %v2430 = vrot.slane %v2294, 1
        %v2435 = vadd.f32 %v2419, %v2427
        %v2436 = vadd.f32 %v2420, %v2428
        %v2437 = vadd.f32 %v2421, %v2429
        %v2438 = vadd.f32 %v2422, %v2430
        %v2443 = vrot.slane %v2337, 2
        %v2444 = vrot.slane %v2340, 2
        %v2445 = vrot.slane %v2345, 2
        %v2446 = vrot.slane %v2348, 2
        %v2451 = vadd.f32 %v2435, %v2443
        %v2452 = vadd.f32 %v2436, %v2444
        %v2453 = vadd.f32 %v2437, %v2445
        %v2454 = vadd.f32 %v2438, %v2446
        %v2455 = vld [vmem:[%s6] sm:$0x1]
        %v2457 = vlaneseq
        %v2458 = vshrl.u32 %v2457, 7
        %v2459 = vsub.s32 0, %v2458
        %v2460 = vrot.slane %v2455, %v2459
        %v2462 = vadd.f32 %v2451, %v2460
        %v2463 = vadd.f32 %v2452, %v2460
        %v2464 = vadd.f32 %v2453, %v2460
        %v2465 = vadd.f32 %v2454, %v2460
        %v2466 = vadd.f32 %v2462, %v717
        %v2467 = vadd.f32 %v2463, %v718
        %v2468 = vadd.f32 %v2464, %v719
        %v2469 = vadd.f32 %v2465, %v720
        %v2470 = vmax.f32 %v2466, 0.0
        %v2471 = vmax.f32 %v2467, 0.0
        %v2472 = vmax.f32 %v2468, 0.0
        %v2473 = vmax.f32 %v2469, 0.0
        %2474 = vst [vmem:[%s413] sm:$0xf] %v2470
        %2475 = vst [vmem:[%s413 + $0x4] sm:$0xf] %v2471
        %2476 = vst [vmem:[%s413 + $0x8] sm:$0xf] %v2472
        %2477 = vst [vmem:[%s413 + $0xc] sm:$0xf] %v2473
        %s2478 = sand.u32 %s192, 1
        %s2479 = scalar_lea.sflag [#allocation6], %s2478
        %s2480 = sand.u32 %s192, 1
        %s2481 = smul.addr %s2480, 64
        %s2482 = scalar_lea.vmem [#allocation12], %s2481
        %s2483 = sand.u32 %s32, 1
        %s2484 = scalar_lea.sflag [#allocation14], %s2483
        %s2485 = sand.u32 %s218, 1
        %s2486 = smul.addr %s2485, 16
        %s2487 = scalar_lea.vmem [#allocation13], %s2486
        %s2488 = sand.u32 %s32, 1
        %s2489 = scalar_lea.sflag [#allocation14], %s2488
        %s2490 = sand.u32 %s244, 1
        %s2491 = smul.addr %s2490, 16
        %s2492 = scalar_lea.vmem [#allocation15], %s2491
        // Predicated region
        $region65: #{tpu_custom_call.1} parent=47 // pred_check
          %p2493 = pneg %p202
        $region66: #{tpu_custom_call.1} parent=47 // pred_check_branch
          %2495 = sbr.rel (%p2493) target = $region68
        $region67: #{tpu_custom_call.1} parent=47 // pred_region
          %s2496 = smul.u32 8, %s32
          %s2498 = ssub.s32 1024, 1024
          %2499 = vsyncadd %s2479, %s2498
          %s2500 = smul.addr %s2496, 128
          %s2501 = scalar_lea.hbm %s7, %s2500
          %s2502 = sshll.u32 %s2482, 4
          %s2503 = int_to_ptr.vmem [resolvable:$true] %s2502
          %2508 = dma.vmem_to_hbm [thread:$0]  %s2503, 1024, %s2501, %s2479, 128, 128, 8
        $region68: #{tpu_custom_call.1} parent=47 // pred_fallthru
          _
        // Predicated region
        $region69: #{tpu_custom_call.1} parent=47 // pred_check
          %p2509 = pneg %p228
        $region70: #{tpu_custom_call.1} parent=47 // pred_check_branch
          %2511 = sbr.rel (%p2509) target = $region72
        $region71: #{tpu_custom_call.1} parent=47 // pred_region
          %s2512 = smul.u32 2, %s32
          %s2514 = ssub.s32 256, 256
          %2515 = vsyncadd %s2484, %s2514
          %s2516 = smul.addr %s2512, 128
          %s2517 = scalar_lea.hbm %s8, %s2516
          %s2518 = sshll.u32 %s2487, 4
          %s2519 = int_to_ptr.vmem [resolvable:$true] %s2518
          %2524 = dma.vmem_to_hbm [thread:$0]  %s2519, 256, %s2517, %s2484, 128, 128, 8
        $region72: #{tpu_custom_call.1} parent=47 // pred_fallthru
          _
        // Predicated region
        $region73: #{tpu_custom_call.1} parent=47 // pred_check
          %p2525 = pneg %p254
        $region74: #{tpu_custom_call.1} parent=47 // pred_check_branch
          %2527 = sbr.rel (%p2525) target = $region76
        $region75: #{tpu_custom_call.1} parent=47 // pred_region
          %s2528 = smul.u32 2, %s32
          %s2530 = ssub.s32 256, 256
          %2531 = vsyncadd %s2489, %s2530
          %s2532 = smul.addr %s2528, 128
          %s2533 = scalar_lea.hbm %s9, %s2532
          %s2534 = sshll.u32 %s2492, 4
          %s2535 = int_to_ptr.vmem [resolvable:$true] %s2534
          %2540 = dma.vmem_to_hbm [thread:$0]  %s2535, 256, %s2533, %s2489, 128, 128, 8
        $region76: #{tpu_custom_call.1} parent=47 // pred_fallthru
          _
      $region48: #{tpu_custom_call.1} parent=5 // pred_fallthru
        _
      %p2541 = scmp.le.s32.totalorder 2, %s27
      // Predicated region
      $region77: #{tpu_custom_call.1} parent=5 // pred_check
        %p2542 = pneg %p2541
      $region78: #{tpu_custom_call.1} parent=5 // pred_check_branch
        %2544 = sbr.rel (%p2542) target = $region80
      $region79: #{tpu_custom_call.1} parent=5 // pred_region
        %s2545 = ssub.s32 %s27, 2
        // Predicated region
        $region81: #{tpu_custom_call.1} parent=79 // pred_check
          %p2546 = pneg %p208
        $region82: #{tpu_custom_call.1} parent=79 // pred_check_branch
          %2548 = sbr.rel (%p2546) target = $region84
        $region83: #{tpu_custom_call.1} parent=79 // pred_region
          %s2549 = sand.u32 %s193, 1
          %s2550 = scalar_lea.sflag [#allocation6], %s2549
          %s2551 = sand.u32 %s193, 1
          %s2552 = smul.addr %s2551, 64
          %s2553 = scalar_lea.vmem [#allocation12], %s2552
          %2554 = dma.done %s2550, 1024
        $region84: #{tpu_custom_call.1} parent=79 // pred_fallthru
          _
        // Predicated region
        $region85: #{tpu_custom_call.1} parent=79 // pred_check
          %p2555 = pneg %p234
        $region86: #{tpu_custom_call.1} parent=79 // pred_check_branch
          %2557 = sbr.rel (%p2555) target = $region88
        $region87: #{tpu_custom_call.1} parent=79 // pred_region
          %s2558 = sand.u32 %s33, 1
          %s2559 = scalar_lea.sflag [#allocation14], %s2558
          %s2560 = sand.u32 %s219, 1
          %s2561 = smul.addr %s2560, 16
          %s2562 = scalar_lea.vmem [#allocation13], %s2561
          %2563 = dma.done %s2559, 256
        $region88: #{tpu_custom_call.1} parent=79 // pred_fallthru
          _
        // Predicated region
        $region89: #{tpu_custom_call.1} parent=79 // pred_check
          %p2564 = pneg %p260
        $region90: #{tpu_custom_call.1} parent=79 // pred_check_branch
          %2566 = sbr.rel (%p2564) target = $region92
        $region91: #{tpu_custom_call.1} parent=79 // pred_region
          %s2567 = sand.u32 %s33, 1
          %s2568 = scalar_lea.sflag [#allocation14], %s2567
          %s2569 = sand.u32 %s245, 1
          %s2570 = smul.addr %s2569, 16
          %s2571 = scalar_lea.vmem [#allocation15], %s2570
          %2572 = dma.done %s2568, 256
        $region92: #{tpu_custom_call.1} parent=79 // pred_fallthru
          _
      $region80: #{tpu_custom_call.1} parent=5 // pred_fallthru
        _
    $region6: #{tpu_custom_call.1} parent=1 // loop_footer
      %s31 = sadd.s32 1, %s27
    $region7: #{tpu_custom_call.1} parent=1 // loop_footer_branch
      %26 = sbr.rel target = $region3
    $region8: #{tpu_custom_call.1} parent=1 // loop_exit
      _
    %2573 = vsyncpa [#allocation5], 1
    %s2574 = scalar_lea.sflag [#allocation5], 1
    %2575 = vsyncpa %s2574, 1
    %2576 = vsyncpa [#allocation8], 1
    %2577 = vsyncpa [#allocation11], 1
    %2578 = vsyncpa [#allocation6], 1
    %s2579 = scalar_lea.sflag [#allocation6], 1
    %2580 = vsyncpa %s2579, 1
    %2581 = vsyncpa [#allocation14], 1
    %s2582 = scalar_lea.sflag [#allocation14], 1
    %2583 = vsyncpa %s2582, 1

</llo_original>
